<compile_context>
chip_gen: v5e
topology: v5e:2x2
jax: 0.10.0
libtpu: 0.0.40
codegen_flags: <defaults>
</compile_context>

<pallas_src>
import functools
import math

import numpy as np
import jax
import jax.numpy as jnp
from jax.experimental import pallas as pl
from jax.experimental.pallas import tpu as pltpu


# ---------------- kernel A: fused projection / XPOS / GroupNorm ------------ #
def _proj_kernel(x_ref, wq_ref, wkv_ref, cos_ref, sin_ref, gnw_ref, gnb_ref,
                 aavg_ref, aind_ref, q_ref, k_ref, v_ref, *, D, eps):
    x = x_ref[...].astype(jnp.bfloat16)                           # (T, Din)

    # One wide MXU matmul -> [Q, Q@R] (rotate_every_two folded into weights).
    q_all = jnp.dot(x, wq_ref[...], preferred_element_type=jnp.float32)
    q, q_rot = q_all[:, :D], q_all[:, D:]
    qx = q * cos_ref[...] + q_rot * sin_ref[...]                  # XPOS(Q)
    q_ref[...] = (qx * jax.nn.sigmoid(qx)).astype(q_ref.dtype)    # swish -> bf16

    # One wide MXU matmul -> [K, K@R, V].
    kv_all = jnp.dot(x, wkv_ref[...], preferred_element_type=jnp.float32)
    k, k_rot, v = kv_all[:, :D], kv_all[:, D:2 * D], kv_all[:, 2 * D:]
    kx = k * cos_ref[...] + k_rot * sin_ref[...]                  # XPOS(K)

    # GroupNorm(num_heads, D) per token: skinny (D,H) averaging matmul plus
    # (H,D) broadcast-back, centered two-pass variance, all stats f32.
    mean = jnp.dot(jnp.dot(kx, aavg_ref[...], preferred_element_type=jnp.float32),
                   aind_ref[...], preferred_element_type=jnp.float32)
    kc = kx - mean
    var = jnp.dot(jnp.dot(kc * kc, aavg_ref[...], preferred_element_type=jnp.float32),
                  aind_ref[...], preferred_element_type=jnp.float32)
    kn = kc * jax.lax.rsqrt(var + eps) * gnw_ref[...] + gnb_ref[...]
    k_ref[...] = kn.astype(k_ref.dtype)
    v_ref[...] = v.astype(v_ref.dtype)


# ---------- kernel B: retention over lower-triangular tile pairs ----------- #
def _retention_kernel(qi_tbl, ki_tbl, q_ref, k_ref, v_ref, res_ref, o_ref,
                      acc_ref, *, num_heads, head_dim, tq, tk, log_gamma):
    s = pl.program_id(1)
    qi = qi_tbl[s]
    ki = ki_tbl[s]

    @pl.when(ki == 0)
    def _init():
        acc_ref[...] = jnp.zeros_like(acc_ref)

    # Factorized decay tile: gamma^(n-m) = gamma^(base+i) * gamma^(-j) with
    # base = q_start - k_start, masked by n>=m. Only tq+tk vector exps per
    # step (EUP), and no exp() on masked (delta<0) entries.
    base = qi * tq - ki * tk
    ii = jax.lax.broadcasted_iota(jnp.int32, (tq, 1), 0) + base   # n - k_start
    jj = jax.lax.broadcasted_iota(jnp.int32, (1, tk), 1)          # m - k_start
    gi = jnp.exp(ii.astype(jnp.float32) * log_gamma)              # gamma^(base+i)
    gj = jnp.exp(jj.astype(jnp.float32) * (-log_gamma))           # gamma^(-j)
    decay = jnp.where(ii >= jj, gi * gj, 0.0)                     # (tq, tk) f32

    q = q_ref[...]                                                # (tq, D) bf16
    k = k_ref[...]                                                # (tk, D) bf16
    v = v_ref[...]                                                # (tk, D) bf16
    contract_last = (((1,), (1,)), ((), ()))                      # no .T needed
    head_out = []
    for h in range(num_heads):
        lo = h * head_dim
        qh = q[:, lo:lo + head_dim]
        kh = k[:, lo:lo + head_dim]
        vh = v[:, lo:lo + head_dim]
        scores = jax.lax.dot_general(qh, kh, contract_last,
                                     preferred_element_type=jnp.float32)
        msr = (scores * decay).astype(jnp.bfloat16)
        head_out.append(jnp.dot(msr, vh, preferred_element_type=jnp.float32))
    # Single full-width, lane-dense accumulator update per step.
    acc_ref[...] += jnp.concatenate(head_out, axis=-1)

    # Finalize on the last KV tile for this query tile: residual + ReLU.
    if tq == tk:
        is_last = ki == qi
    else:
        is_last = ki == (qi * tq + tq - 1) // tk

    @pl.when(is_last)
    def _finalize():
        res = res_ref[...].astype(jnp.float32)
        o_ref[...] = jnp.maximum(acc_ref[...] + res, 0.0).astype(o_ref.dtype)


# ------------------------------- wrapper ------------------------------------ #
def multi_head_self_msr(x, wq_t, wk_t, wv_t, cosx, sinx, gnw, gnb, *,
                        num_heads, gamma, tq=128, tk=128, eps=1e-5):
    B, S, Din = x.shape
    D = wq_t.shape[1]
    assert D % num_heads == 0
    head_dim = D // num_heads
    assert S % tq == 0 and S % tk == 0
    # Residual is X itself only in the W_res-is-None configuration.
    assert Din == D, "input_dim != MSR_dim (W_res path) not implemented"
    # f32 headroom for the factorized decay row vector gamma^(-j).
    assert tk * abs(math.log(gamma)) < 80.0

    # Fold the rotate_every_two signed permutation into the projection weights
    # and fuse them into two wide bf16 matmul operands.
    rot = jnp.asarray(rotate_every_two_matrix(D))
    w_q_fused = jnp.concatenate([wq_t, wq_t @ rot], axis=1).astype(jnp.bfloat16)         # (Din, 2D)
    w_kv_fused = jnp.concatenate([wk_t, wk_t @ rot, wv_t], axis=1).astype(jnp.bfloat16)  # (Din, 3D)

    # Skinny group-stat operands (replace the old dense DxD averaging matrix).
    a_avg = jnp.asarray(group_average_matrix(D, num_heads))        # (D, H)
    a_ind = jnp.asarray(group_indicator_matrix(D, num_heads))      # (H, D)

    # ---- pass 1: projections + XPOS + swish + GroupNorm, once per token ----
    tp = tq
    shared = lambda b, i: (0, 0)
    q_s, k_s, v_s = pl.pallas_call(
        functools.partial(_proj_kernel, D=D, eps=eps),
        out_shape=(jax.ShapeDtypeStruct((B, S, D), jnp.bfloat16),) * 3,
        grid=(B, S // tp),
        in_specs=[
            pl.BlockSpec((pl.Squeezed(), tp, Din), lambda b, i: (b, i, 0)),  # x tile
            pl.BlockSpec((Din, 2 * D), shared),                              # [Wq, Wq@R]
            pl.BlockSpec((Din, 3 * D), shared),                              # [Wk, Wk@R, Wv]
            pl.BlockSpec((tp, D), lambda b, i: (i, 0)),                      # xpos cos
            pl.BlockSpec((tp, D), lambda b, i: (i, 0)),                      # xpos sin
            pl.BlockSpec((1, D), shared),                                    # GN weight
            pl.BlockSpec((1, D), shared),                                    # GN bias
            pl.BlockSpec((D, num_heads), shared),                            # group avg (D,H)
            pl.BlockSpec((num_heads, D), shared),                            # group bcast (H,D)
        ],
        out_specs=(pl.BlockSpec((pl.Squeezed(), tp, D), lambda b, i: (b, i, 0)),) * 3,
        compiler_params=pltpu.CompilerParams(
            dimension_semantics=("parallel", "parallel"),
            vmem_limit_bytes=48 * 1024 * 1024),
    )(x, w_q_fused, w_kv_fused, cosx, sinx, gnw, gnb, a_avg, a_ind)

    # ---- pass 2: flash-style retention over lower-triangular tile pairs ----
    nq, nk = S // tq, S // tk
    pairs = [(q_i, k_i) for q_i in range(nq) for k_i in range(nk)
             if k_i * tk <= q_i * tq + tq - 1]          # tiles with unmasked work
    qi_tbl = jnp.asarray([p[0] for p in pairs], jnp.int32)
    ki_tbl = jnp.asarray([p[1] for p in pairs], jnp.int32)

    kernel = functools.partial(_retention_kernel, num_heads=num_heads,
                               head_dim=head_dim, tq=tq, tk=tk,
                               log_gamma=float(np.log(gamma)))
    return pl.pallas_call(
        kernel,
        out_shape=jax.ShapeDtypeStruct((B, S, D), jnp.float32),
        grid_spec=pltpu.PrefetchScalarGridSpec(
            num_scalar_prefetch=2,
            grid=(B, len(pairs)),
            in_specs=[
                pl.BlockSpec((pl.Squeezed(), tq, D),
                             lambda b, s, qt, kt: (b, qt[s], 0)),   # Q' tile
                pl.BlockSpec((pl.Squeezed(), tk, D),
                             lambda b, s, qt, kt: (b, kt[s], 0)),   # K_norm tile
                pl.BlockSpec((pl.Squeezed(), tk, D),
                             lambda b, s, qt, kt: (b, kt[s], 0)),   # V tile
                pl.BlockSpec((pl.Squeezed(), tq, D),
                             lambda b, s, qt, kt: (b, qt[s], 0)),   # residual X tile
            ],
            out_specs=pl.BlockSpec((pl.Squeezed(), tq, D),
                                   lambda b, s, qt, kt: (b, qt[s], 0)),
            scratch_shapes=[pltpu.VMEM((tq, D), jnp.float32)],      # accumulator
        ),
        compiler_params=pltpu.CompilerParams(
            dimension_semantics=("parallel", "arbitrary"),
            vmem_limit_bytes=48 * 1024 * 1024),
    )(qi_tbl, ki_tbl, q_s, k_s, v_s, x)


# ------------------------ host-side parameter glue -------------------------- #
def xpos_cos_sin(seq_len, dim, scale_base=512.0):
    """Duplicate-interleaved (cos*scale, sin*scale) of standard RetNet XPOS."""
    half = dim // 2
    base_scale = (np.arange(0, dim, 2, dtype=np.float64) + 0.4 * dim) / (1.4 * dim)
    power = np.arange(seq_len, dtype=np.float64)[:, None] / scale_base
    scale = base_scale[None, :] ** power                                  # (S, half)
    inv_freq = 1.0 / (10000.0 ** (np.arange(0, half, dtype=np.float64) / half))
    sinusoid = np.arange(seq_len, dtype=np.float64)[:, None] * inv_freq[None, :]
    cos_s = np.cos(sinusoid) * scale
    sin_s = np.sin(sinusoid) * scale
    dup = lambda t: np.repeat(t, 2, axis=-1)          # [a,b,...] -> [a,a,b,b,...]
    return dup(cos_s).astype(np.float32), dup(sin_s).astype(np.float32)


def rotate_every_two_matrix(dim):
    """R such that (x @ R)[:, 2i] = -x[:, 2i+1], (x @ R)[:, 2i+1] = x[:, 2i]."""
    R = np.zeros((dim, dim), np.float32)
    for i in range(dim // 2):
        R[2 * i + 1, 2 * i] = -1.0
        R[2 * i, 2 * i + 1] = 1.0
    return R


def group_average_matrix(dim, num_heads):
    """(D, H): column h averages the channels of group h."""
    hd = dim // num_heads
    A = np.zeros((dim, num_heads), np.float32)
    for h in range(num_heads):
        A[h * hd:(h + 1) * hd, h] = 1.0 / hd
    return A


def group_indicator_matrix(dim, num_heads):
    """(H, D): row h broadcasts a per-group scalar back onto group h's channels."""
    hd = dim // num_heads
    A = np.zeros((num_heads, dim), np.float32)
    for h in range(num_heads):
        A[h, h * hd:(h + 1) * hd] = 1.0
    return A


def retention_decay(seq_len, gamma):
    n = np.arange(seq_len)[:, None]
    m = np.arange(seq_len)[None, :]
    return np.where(n >= m, np.power(gamma, (n - m).astype(np.float64)),
                    0.0).astype(np.float32)


# --------------------------- pure-JAX reference ------------------------------ #
def reference(x, wq_t, wk_t, wv_t, rot, cosx, sinx, gnw, gnb, dmat, num_heads):
    q = x @ wq_t
    k = x @ wk_t
    v = x @ wv_t
    q = q * cosx + (q @ rot) * sinx
    k = k * cosx + (k @ rot) * sinx
    B, S, D = k.shape
    hd = D // num_heads
    kk = k.reshape(B, S, num_heads, hd)
    mean = kk.mean(-1, keepdims=True)
    var = kk.var(-1, keepdims=True)
    kk = (kk - mean) / jnp.sqrt(var + 1e-5)
    k = kk.reshape(B, S, D) * gnw + gnb
    qs = q * jax.nn.sigmoid(q)
    qh = qs.reshape(B, S, num_heads, hd).transpose(0, 2, 1, 3)
    kh = k.reshape(B, S, num_heads, hd).transpose(0, 2, 1, 3)
    vh = v.reshape(B, S, num_heads, hd).transpose(0, 2, 1, 3)
    scores = jnp.einsum('bhsd,bhtd->bhst', qh, kh)
    msr = scores * dmat[None, None]
    out = jnp.einsum('bhst,bhtd->bhsd', msr, vh)
    out = out.transpose(0, 2, 1, 3).reshape(B, S, D)
    return jnp.maximum(out + x, 0.0)


# --------------------------------- main -------------------------------------- #
if __name__ == "__main__":
    B, S = 2, 256
    input_dim = 128          # MSR_dim defaults to input_dim -> W_res is None
    MSR_dim = 128            # multiple of 128 -> lane-dense tiles / output
    num_heads = 4
    gamma = 0.9

    key = jax.random.PRNGKey(0)
    kx, kq, kk_, kv = jax.random.split(key, 4)
    x = jax.random.normal(kx, (B, S, input_dim), jnp.float32)

    # nn.Linear stores weights as (out, in); pre-transpose to (in, out) for x @ W^T.
    wq_t = (0.1 * jax.random.normal(kq, (MSR_dim, input_dim), jnp.float32)).T
    wk_t = (0.1 * jax.random.normal(kk_, (MSR_dim, input_dim), jnp.float32)).T
    wv_t = (0.1 * jax.random.normal(kv, (MSR_dim, input_dim), jnp.float32)).T

    # GroupNorm affine params (PyTorch default init: weight=1, bias=0).
    gnw = jnp.ones((1, MSR_dim), jnp.float32)
    gnb = jnp.zeros((1, MSR_dim), jnp.float32)

    cos_np, sin_np = xpos_cos_sin(S, MSR_dim)
    cosx = jnp.asarray(cos_np)
    sinx = jnp.asarray(sin_np)

    out = multi_head_self_msr(x, wq_t, wk_t, wv_t, cosx, sinx, gnw, gnb,
                              num_heads=num_heads, gamma=gamma, tq=128, tk=128)
    out = jax.block_until_ready(out)

    rot = jnp.asarray(rotate_every_two_matrix(MSR_dim))
    dmat = jnp.asarray(retention_decay(S, gamma))   # reference only; kernel builds it in-VMEM
    ref = jax.block_until_ready(
        reference(x, wq_t, wk_t, wv_t, rot, cosx, sinx, gnw, gnb, dmat, num_heads))

    # bf16 MXU operands (f32 accumulation) vs a pure-f32 reference, with up to
    # ~256-term retention accumulations and outputs of magnitude O(30):
    # allow 5% relative plus a small absolute floor (~2-3% of dynamic range).
    np.testing.assert_allclose(np.asarray(out), np.asarray(ref), rtol=5e-2, atol=1.0)

    print("KERNEL_OK")
</pallas_src>

<mosaic_0001>
module attributes {stable_mosaic.version = 11 : i64} {
  func.func @_proj_kernel(%arg0: i32, %arg1: i32, %arg2: memref<1x128x128xf32, #tpu.memory_space<vmem>>, %arg3: memref<128x256xbf16, #tpu.memory_space<vmem>>, %arg4: memref<128x384xbf16, #tpu.memory_space<vmem>>, %arg5: memref<128x128xf32, #tpu.memory_space<vmem>>, %arg6: memref<128x128xf32, #tpu.memory_space<vmem>>, %arg7: memref<1x128xf32, #tpu.memory_space<vmem>>, %arg8: memref<1x128xf32, #tpu.memory_space<vmem>>, %arg9: memref<128x4xf32, #tpu.memory_space<vmem>>, %arg10: memref<4x128xf32, #tpu.memory_space<vmem>>, %arg11: memref<1x128x128xbf16, #tpu.memory_space<vmem>>, %arg12: memref<1x128x128xbf16, #tpu.memory_space<vmem>>, %arg13: memref<1x128x128xbf16, #tpu.memory_space<vmem>>) attributes {dimension_semantics = [#tpu.dimension_semantics<parallel>, #tpu.dimension_semantics<parallel>], iteration_bounds = array<i64: 2, 2>, scalar_prefetch = 0 : i64, scratch_operands = 0 : i64, tpu.core_type = #tpu.core_type<tc>, window_params = [{transform_indices = @transform_0, window_bounds = array<i64: 1, 128, 128>}, {pipeline_mode = #tpu.pipeline_mode<synchronous>, transform_indices = @transform_1, window_bounds = array<i64: 128, 256>}, {pipeline_mode = #tpu.pipeline_mode<synchronous>, transform_indices = @transform_2, window_bounds = array<i64: 128, 384>}, {transform_indices = @transform_3, window_bounds = array<i64: 128, 128>}, {transform_indices = @transform_4, window_bounds = array<i64: 128, 128>}, {pipeline_mode = #tpu.pipeline_mode<synchronous>, transform_indices = @transform_5, window_bounds = array<i64: 1, 128>}, {pipeline_mode = #tpu.pipeline_mode<synchronous>, transform_indices = @transform_6, window_bounds = array<i64: 1, 128>}, {pipeline_mode = #tpu.pipeline_mode<synchronous>, transform_indices = @transform_7, window_bounds = array<i64: 128, 4>}, {pipeline_mode = #tpu.pipeline_mode<synchronous>, transform_indices = @transform_8, window_bounds = array<i64: 4, 128>}, {transform_indices = @transform_9, window_bounds = array<i64: 1, 128, 128>}, {transform_indices = @transform_10, window_bounds = array<i64: 1, 128, 128>}, {transform_indices = @transform_11, window_bounds = array<i64: 1, 128, 128>}]} {
    %c0 = arith.constant 0 : index
    %c0_0 = arith.constant 0 : index
    %c0_1 = arith.constant 0 : index
    %0 = vector.load %arg2[%c0, %c0_0, %c0_1] : memref<1x128x128xf32, #tpu.memory_space<vmem>>, vector<1x128x128xf32>
    %1 = vector.shape_cast %0 : vector<1x128x128xf32> to vector<128x128xf32>
    %2 = arith.truncf %1 : vector<128x128xf32> to vector<128x128xbf16>
    %c0_2 = arith.constant 0 : index
    %c0_3 = arith.constant 0 : index
    %3 = vector.load %arg3[%c0_2, %c0_3] : memref<128x256xbf16, #tpu.memory_space<vmem>>, vector<128x256xbf16>
    %cst = arith.constant dense<0.000000e+00> : vector<128x256xf32>
    %4 = tpu.matmul %2, %3, %cst {dimension_numbers = #tpu.dot_dimension_numbers<[1], [0], [0], [1], [0, 0, 1, 1], [], []>} : vector<128x128xbf16>, vector<128x256xbf16>, vector<128x256xf32> -> vector<128x256xf32>
    %5 = vector.extract_strided_slice %4 {offsets = [0, 0], sizes = [128, 128], strides = [1, 1]} : vector<128x256xf32> to vector<128x128xf32>
    %6 = vector.extract_strided_slice %4 {offsets = [0, 128], sizes = [128, 128], strides = [1, 1]} : vector<128x256xf32> to vector<128x128xf32>
    %c0_4 = arith.constant 0 : index
    %c0_5 = arith.constant 0 : index
    %7 = vector.load %arg5[%c0_4, %c0_5] : memref<128x128xf32, #tpu.memory_space<vmem>>, vector<128x128xf32>
    %8 = arith.mulf %5, %7 : vector<128x128xf32>
    %c0_6 = arith.constant 0 : index
    %c0_7 = arith.constant 0 : index
    %9 = vector.load %arg6[%c0_6, %c0_7] : memref<128x128xf32, #tpu.memory_space<vmem>>, vector<128x128xf32>
    %10 = arith.mulf %6, %9 : vector<128x128xf32>
    %11 = arith.addf %8, %10 : vector<128x128xf32>
    %12 = arith.negf %11 : vector<128x128xf32>
    %13 = math.exp %12 : vector<128x128xf32>
    %cst_8 = arith.constant 1.000000e+00 : f32
    %14 = vector.broadcast %cst_8 : f32 to vector<128x128xf32>
    %15 = arith.addf %14, %13 : vector<128x128xf32>
    %16 = arith.divf %14, %15 : vector<128x128xf32>
    %17 = arith.mulf %11, %16 : vector<128x128xf32>
    %18 = arith.truncf %17 : vector<128x128xf32> to vector<128x128xbf16>
    %c0_9 = arith.constant 0 : index
    %c0_10 = arith.constant 0 : index
    %c0_11 = arith.constant 0 : index
    %19 = vector.load %arg11[%c0_9, %c0_10, %c0_11] : memref<1x128x128xbf16, #tpu.memory_space<vmem>>, vector<1x128x128xbf16>
    %20 = vector.shape_cast %19 : vector<1x128x128xbf16> to vector<128x128xbf16>
    %21 = vector.shape_cast %18 : vector<128x128xbf16> to vector<1x128x128xbf16>
    tpu.vector_store %arg11[%c0_9, %c0_10, %c0_11], %21 {strides = array<i32>} : memref<1x128x128xbf16, #tpu.memory_space<vmem>>, vector<1x128x128xbf16>,
    %c0_12 = arith.constant 0 : index
    %c0_13 = arith.constant 0 : index
    %22 = vector.load %arg4[%c0_12, %c0_13] : memref<128x384xbf16, #tpu.memory_space<vmem>>, vector<128x384xbf16>
    %cst_14 = arith.constant dense<0.000000e+00> : vector<128x384xf32>
    %23 = tpu.matmul %2, %22, %cst_14 {dimension_numbers = #tpu.dot_dimension_numbers<[1], [0], [0], [1], [0, 0, 1, 1], [], []>} : vector<128x128xbf16>, vector<128x384xbf16>, vector<128x384xf32> -> vector<128x384xf32>
    %24 = vector.extract_strided_slice %23 {offsets = [0, 0], sizes = [128, 128], strides = [1, 1]} : vector<128x384xf32> to vector<128x128xf32>
    %25 = vector.extract_strided_slice %23 {offsets = [0, 128], sizes = [128, 128], strides = [1, 1]} : vector<128x384xf32> to vector<128x128xf32>
    %26 = vector.extract_strided_slice %23 {offsets = [0, 256], sizes = [128, 128], strides = [1, 1]} : vector<128x384xf32> to vector<128x128xf32>
    %c0_15 = arith.constant 0 : index
    %c0_16 = arith.constant 0 : index
    %27 = vector.load %arg5[%c0_15, %c0_16] : memref<128x128xf32, #tpu.memory_space<vmem>>, vector<128x128xf32>
    %28 = arith.mulf %24, %27 : vector<128x128xf32>
    %c0_17 = arith.constant 0 : index
    %c0_18 = arith.constant 0 : index
    %29 = vector.load %arg6[%c0_17, %c0_18] : memref<128x128xf32, #tpu.memory_space<vmem>>, vector<128x128xf32>
    %30 = arith.mulf %25, %29 : vector<128x128xf32>
    %31 = arith.addf %28, %30 : vector<128x128xf32>
    %c0_19 = arith.constant 0 : index
    %c0_20 = arith.constant 0 : index
    %32 = vector.load %arg9[%c0_19, %c0_20] : memref<128x4xf32, #tpu.memory_space<vmem>>, vector<128x4xf32>
    %cst_21 = arith.constant dense<0.000000e+00> : vector<128x4xf32>
    %33 = tpu.matmul %31, %32, %cst_21 {dimension_numbers = #tpu.dot_dimension_numbers<[1], [0], [0], [1], [0, 0, 1, 1], [], []>} : vector<128x128xf32>, vector<128x4xf32>, vector<128x4xf32> -> vector<128x4xf32>
    %c0_22 = arith.constant 0 : index
    %c0_23 = arith.constant 0 : index
    %34 = vector.load %arg10[%c0_22, %c0_23] : memref<4x128xf32, #tpu.memory_space<vmem>>, vector<4x128xf32>
    %cst_24 = arith.constant dense<0.000000e+00> : vector<128x128xf32>
    %35 = tpu.matmul %33, %34, %cst_24 {dimension_numbers = #tpu.dot_dimension_numbers<[1], [0], [0], [1], [0, 0, 1, 1], [], []>} : vector<128x4xf32>, vector<4x128xf32>, vector<128x128xf32> -> vector<128x128xf32>
    %36 = arith.subf %31, %35 : vector<128x128xf32>
    %37 = arith.mulf %36, %36 : vector<128x128xf32>
    %c0_25 = arith.constant 0 : index
    %c0_26 = arith.constant 0 : index
    %38 = vector.load %arg9[%c0_25, %c0_26] : memref<128x4xf32, #tpu.memory_space<vmem>>, vector<128x4xf32>
    %cst_27 = arith.constant dense<0.000000e+00> : vector<128x4xf32>
    %39 = tpu.matmul %37, %38, %cst_27 {dimension_numbers = #tpu.dot_dimension_numbers<[1], [0], [0], [1], [0, 0, 1, 1], [], []>} : vector<128x128xf32>, vector<128x4xf32>, vector<128x4xf32> -> vector<128x4xf32>
    %c0_28 = arith.constant 0 : index
    %c0_29 = arith.constant 0 : index
    %40 = vector.load %arg10[%c0_28, %c0_29] : memref<4x128xf32, #tpu.memory_space<vmem>>, vector<4x128xf32>
    %cst_30 = arith.constant dense<0.000000e+00> : vector<128x128xf32>
    %41 = tpu.matmul %39, %40, %cst_30 {dimension_numbers = #tpu.dot_dimension_numbers<[1], [0], [0], [1], [0, 0, 1, 1], [], []>} : vector<128x4xf32>, vector<4x128xf32>, vector<128x128xf32> -> vector<128x128xf32>
    %cst_31 = arith.constant 9.99999974E-6 : f32
    %42 = vector.broadcast %cst_31 : f32 to vector<128x128xf32>
    %43 = arith.addf %41, %42 : vector<128x128xf32>
    %44 = math.rsqrt %43 : vector<128x128xf32>
    %45 = arith.mulf %36, %44 : vector<128x128xf32>
    %c0_32 = arith.constant 0 : index
    %c0_33 = arith.constant 0 : index
    %46 = vector.load %arg7[%c0_32, %c0_33] : memref<1x128xf32, #tpu.memory_space<vmem>>, vector<1x128xf32>
    %47 = vector.broadcast %46 : vector<1x128xf32> to vector<128x128xf32>
    %48 = arith.mulf %45, %47 : vector<128x128xf32>
    %c0_34 = arith.constant 0 : index
    %c0_35 = arith.constant 0 : index
    %49 = vector.load %arg8[%c0_34, %c0_35] : memref<1x128xf32, #tpu.memory_space<vmem>>, vector<1x128xf32>
    %50 = vector.broadcast %49 : vector<1x128xf32> to vector<128x128xf32>
    %51 = arith.addf %48, %50 : vector<128x128xf32>
    %52 = arith.truncf %51 : vector<128x128xf32> to vector<128x128xbf16>
    %c0_36 = arith.constant 0 : index
    %c0_37 = arith.constant 0 : index
    %c0_38 = arith.constant 0 : index
    %53 = vector.load %arg12[%c0_36, %c0_37, %c0_38] : memref<1x128x128xbf16, #tpu.memory_space<vmem>>, vector<1x128x128xbf16>
    %54 = vector.shape_cast %53 : vector<1x128x128xbf16> to vector<128x128xbf16>
    %55 = vector.shape_cast %52 : vector<128x128xbf16> to vector<1x128x128xbf16>
    tpu.vector_store %arg12[%c0_36, %c0_37, %c0_38], %55 {strides = array<i32>} : memref<1x128x128xbf16, #tpu.memory_space<vmem>>, vector<1x128x128xbf16>,
    %56 = arith.truncf %26 : vector<128x128xf32> to vector<128x128xbf16>
    %c0_39 = arith.constant 0 : index
    %c0_40 = arith.constant 0 : index
    %c0_41 = arith.constant 0 : index
    %57 = vector.load %arg13[%c0_39, %c0_40, %c0_41] : memref<1x128x128xbf16, #tpu.memory_space<vmem>>, vector<1x128x128xbf16>
    %58 = vector.shape_cast %57 : vector<1x128x128xbf16> to vector<128x128xbf16>
    %59 = vector.shape_cast %56 : vector<128x128xbf16> to vector<1x128x128xbf16>
    tpu.vector_store %arg13[%c0_39, %c0_40, %c0_41], %59 {strides = array<i32>} : memref<1x128x128xbf16, #tpu.memory_space<vmem>>, vector<1x128x128xbf16>,
    return
  }
  func.func @transform_0(%arg0: i32, %arg1: i32) -> (i32, i32, i32) {
    %c0_i32 = arith.constant 0 : i32
    %c0_i32_0 = arith.constant 0 : i32
    return %arg0, %arg1, %c0_i32 : i32, i32, i32
  }
  func.func @transform_1(%arg0: i32, %arg1: i32) -> (i32, i32) {
    %c0_i32 = arith.constant 0 : i32
    %c0_i32_0 = arith.constant 0 : i32
    %c0_i32_1 = arith.constant 0 : i32
    return %c0_i32, %c0_i32_0 : i32, i32
  }
  func.func @transform_2(%arg0: i32, %arg1: i32) -> (i32, i32) {
    %c0_i32 = arith.constant 0 : i32
    %c0_i32_0 = arith.constant 0 : i32
    %c0_i32_1 = arith.constant 0 : i32
    return %c0_i32, %c0_i32_0 : i32, i32
  }
  func.func @transform_3(%arg0: i32, %arg1: i32) -> (i32, i32) {
    %c0_i32 = arith.constant 0 : i32
    %c0_i32_0 = arith.constant 0 : i32
    return %arg1, %c0_i32 : i32, i32
  }
  func.func @transform_4(%arg0: i32, %arg1: i32) -> (i32, i32) {
    %c0_i32 = arith.constant 0 : i32
    %c0_i32_0 = arith.constant 0 : i32
    return %arg1, %c0_i32 : i32, i32
  }
  func.func @transform_5(%arg0: i32, %arg1: i32) -> (i32, i32) {
    %c0_i32 = arith.constant 0 : i32
    %c0_i32_0 = arith.constant 0 : i32
    %c0_i32_1 = arith.constant 0 : i32
    return %c0_i32, %c0_i32_0 : i32, i32
  }
  func.func @transform_6(%arg0: i32, %arg1: i32) -> (i32, i32) {
    %c0_i32 = arith.constant 0 : i32
    %c0_i32_0 = arith.constant 0 : i32
    %c0_i32_1 = arith.constant 0 : i32
    return %c0_i32, %c0_i32_0 : i32, i32
  }
  func.func @transform_7(%arg0: i32, %arg1: i32) -> (i32, i32) {
    %c0_i32 = arith.constant 0 : i32
    %c0_i32_0 = arith.constant 0 : i32
    %c0_i32_1 = arith.constant 0 : i32
    return %c0_i32, %c0_i32_0 : i32, i32
  }
  func.func @transform_8(%arg0: i32, %arg1: i32) -> (i32, i32) {
    %c0_i32 = arith.constant 0 : i32
    %c0_i32_0 = arith.constant 0 : i32
    %c0_i32_1 = arith.constant 0 : i32
    return %c0_i32, %c0_i32_0 : i32, i32
  }
  func.func @transform_9(%arg0: i32, %arg1: i32) -> (i32, i32, i32) {
    %c0_i32 = arith.constant 0 : i32
    %c0_i32_0 = arith.constant 0 : i32
    return %arg0, %arg1, %c0_i32 : i32, i32, i32
  }
  func.func @transform_10(%arg0: i32, %arg1: i32) -> (i32, i32, i32) {
    %c0_i32 = arith.constant 0 : i32
    %c0_i32_0 = arith.constant 0 : i32
    return %arg0, %arg1, %c0_i32 : i32, i32, i32
  }
  func.func @transform_11(%arg0: i32, %arg1: i32) -> (i32, i32, i32) {
    %c0_i32 = arith.constant 0 : i32
    %c0_i32_0 = arith.constant 0 : i32
    return %arg0, %arg1, %c0_i32 : i32, i32, i32
  }
}

</mosaic_0001>

<llo_original>
// kernel: tpu_custom_call.1
$region0: #{tpu_custom_call.1}
  #allocation0 [shape = 'u32[]', space=smem, size = 0x4, offset = 0x4, fixed_abs, tag = 'smem constant byte address 0x4 - core index']
  #allocation1 [shape = 'u32[72,128]{1,0:T(1,128)}', space=vmem, size = 0x9000, scoped, tag = 'internal scratch']
  %s0 = inlined_call_operand.hbm [shape: f32[2,256,128], index: 0, kind: input, shape index: {}]
  %s1 = inlined_call_operand.vmem [shape: bf16[128,256], index: 1, kind: input, shape index: {}]
  %s2 = inlined_call_operand.hbm [shape: bf16[128,384], index: 2, kind: input, shape index: {}]
  %s3 = inlined_call_operand.hbm [shape: f32[256,128], index: 3, kind: input, shape index: {}]
  %s4 = inlined_call_operand.hbm [shape: f32[256,128], index: 4, kind: input, shape index: {}]
  %s5 = inlined_call_operand.vmem [shape: f32[1,128], index: 5, kind: input, shape index: {}]
  %s6 = inlined_call_operand.vmem [shape: f32[1,128], index: 6, kind: input, shape index: {}]
  %s7 = inlined_call_operand.vmem [shape: f32[128,4], index: 7, kind: input, shape index: {}]
  %s8 = inlined_call_operand.vmem [shape: f32[4,128], index: 8, kind: input, shape index: {}]
  %s9 = inlined_call_operand.hbm [shape: bf16[2,256,128], index: 9, kind: output, shape index: {0}]
  %s10 = inlined_call_operand.hbm [shape: bf16[2,256,128], index: 10, kind: output, shape index: {1}]
  %s11 = inlined_call_operand.hbm [shape: bf16[2,256,128], index: 11, kind: output, shape index: {2}]
  %12 = xla_tuple %s9, %s10, %s11
  %s13 = sld [smem:[#allocation0]]
  $region101: #{tpu_custom_call.1} parent=0
    _
  %s15 = ssub.s32 1, %s13
  %s16 = scalar_select 0, %s15, %s13
  $region1: #{tpu_custom_call.1} parent=0
    #allocation2 [shape = 'u8[131072]{0}', space=vmem, size = 0x20000, scoped, tag = 'input window, operand 0']
    #allocation3 [shape = 's32[2]{0}', space=sflag, size = 0x8, scoped, tag = 'scoped memory for tpu_custom_call.1']
    #allocation4 [shape = 's32[2]{0}', space=sflag, size = 0x8, scoped, tag = 'scoped memory for tpu_custom_call.1']
    #allocation5 [shape = 'u8[98304]{0}', space=vmem, size = 0x18000, scoped, tag = 'input window, operand 2, single buffered']
    #allocation6 [shape = 's32[1]{0}', space=sflag, size = 0x4, scoped, tag = 'scoped memory for tpu_custom_call.1']
    #allocation7 [shape = 'u8[131072]{0}', space=vmem, size = 0x20000, scoped, tag = 'input window, operand 3']
    #allocation8 [shape = 'u8[131072]{0}', space=vmem, size = 0x20000, scoped, tag = 'input window, operand 4']
    #allocation9 [shape = 'u8[65536]{0}', space=vmem, size = 0x10000, scoped, tag = 'output window, operand 0']
    #allocation10 [shape = 'u8[65536]{0}', space=vmem, size = 0x10000, scoped, tag = 'output window, operand 1']
    #allocation11 [shape = 's32[2]{0}', space=sflag, size = 0x8, scoped, tag = 'scoped memory for tpu_custom_call.1']
    #allocation12 [shape = 'u8[65536]{0}', space=vmem, size = 0x10000, scoped, tag = 'output window, operand 2']
    %17 = vsyncpa [#allocation3], 0
    %s18 = scalar_lea.sflag [#allocation3], 1
    %19 = vsyncpa %s18, 0
    %20 = vsyncpa [#allocation6], 0
    %21 = vsyncpa [#allocation4], 0
    %s22 = scalar_lea.sflag [#allocation4], 1
    %23 = vsyncpa %s22, 0
    %24 = vsyncpa [#allocation11], 0
    %s25 = scalar_lea.sflag [#allocation11], 1
    %26 = vsyncpa %s25, 0
    loop: start=0, step=1, limit=6
    $region2: #{tpu_custom_call.1} parent=1 // loop_pre_header
      _
    $region3: #{tpu_custom_call.1} parent=1 // loop_header
      %s28 = sphi 0, %s32
      %p29 = scmp.ge.s32.totalorder %s28, 6
      %s35 = sphi 0, %s47
      %s36 = sphi 0, %s43
      %s37 = sphi 0, %s35
      %s38 = sphi 0, %s36
      %s39 = sphi 0, %s37
      %s40 = sphi 0, %s38
      %s52 = sphi 0, %s54
      %s55 = sphi 0, %s52
      %s56 = sphi 0, %s55
      %s72 = sphi 0, %s56
      %s76 = sphi 0, %s76
      %s78 = sphi 0, %s76
      %s79 = sphi 0, %s78
      %s93 = sphi 0, %s79
      %s97 = sphi 0, %s97
      %s99 = sphi 0, %s97
      %s100 = sphi 0, %s99
      %s114 = sphi 0, %s100
      %s120 = sphi 0, %s122
      %s123 = sphi 0, %s120
      %s124 = sphi 0, %s123
      %s140 = sphi 0, %s124
      %s146 = sphi 0, %s148
      %s149 = sphi 0, %s146
      %s150 = sphi 0, %s149
      %s166 = sphi 0, %s150
      %s170 = sphi 0, %s170
      %s172 = sphi 0, %s170
      %s173 = sphi 0, %s172
      %s187 = sphi 0, %s173
      %s191 = sphi 0, %s191
      %s193 = sphi 0, %s191
      %s194 = sphi 0, %s193
      %s208 = sphi 0, %s194
      %s212 = sphi 0, %s212
      %s214 = sphi 0, %s212
      %s215 = sphi 0, %s214
      %s229 = sphi 0, %s215
      %s233 = sphi 0, %s233
      %s235 = sphi 0, %s233
      %s236 = sphi 0, %s235
      %s250 = sphi 0, %s236
      %s258 = sphi 0, %s260
      %s261 = sphi 0, %s258
      %s262 = sphi 0, %s261
      %s278 = sphi 0, %s262
      %s286 = sphi 0, %s288
      %s289 = sphi 0, %s286
      %s290 = sphi 0, %s289
      %s306 = sphi 0, %s290
      %s314 = sphi 0, %s316
      %s317 = sphi 0, %s314
      %s318 = sphi 0, %s317
      %s334 = sphi 0, %s318
    $region4: #{tpu_custom_call.1} parent=1 // loop_header_branch
      %31 = sbr.rel (%p29) target = $region8
    $region5: #{tpu_custom_call.1} parent=1 // loop_body
      %s33 = ssub.s32 %s28, 1
      %s34 = ssub.s32 %s28, 2
      %s41 = sadd.s32 1, %s36
      %p42 = scmp.ge.s32.totalorder %s41, 2
      %s43 = scalar_select %p42, 0, %s41
      %s44 = sadd.s32 1, %s35
      %s45 = scalar_select %p42, %s44, %s35
      %p46 = scmp.ge.s32.totalorder %s45, 2
      %s47 = scalar_select %p46, 0, %s45
      %s48 = ssub.s32 %s35, %s47
      %s49 = ssub.s32 %s36, %s43
      %s50 = sor.u32 %s48, %s49
      %p51 = scmp.eq.s32.totalorder %s50, 0
      %s53 = sadd.s32 %s52, 1
      %s54 = scalar_select %p51, %s52, %s53
      %p57 = pneg %p51
      %p58 = scmp.eq.s32.totalorder %s28, 3
      %p59 = por %p57, %p58
      %p60 = scmp.ne.s32.totalorder %s52, %s55
      %p61 = scmp.eq.s32.totalorder %s28, 0
      %p62 = por %p60, %p61
      %p63 = scmp.ne.s32.totalorder %s52, %s55
      %p64 = scmp.eq.s32.totalorder %s33, 3
      %p65 = por %p63, %p64
      %p66 = scmp.ne.s32.totalorder %s55, %s56
      %p67 = scmp.eq.s32.totalorder %s33, 0
      %p68 = por %p66, %p67
      %p69 = scmp.ne.s32.totalorder %s55, %s56
      %p70 = scmp.eq.s32.totalorder %s34, 3
      %p71 = por %p69, %p70
      %p73 = scmp.ne.s32.totalorder %s56, %s72
      %p74 = scmp.eq.s32.totalorder %s34, 0
      %p75 = por %p73, %p74
      %s77 = sadd.s32 %s76, 1
      %p80 = scmp.eq.s32.totalorder %s28, 3
      %p81 = scmp.ne.s32.totalorder %s76, %s78
      %p82 = scmp.eq.s32.totalorder %s28, 0
      %p83 = por %p81, %p82
      %p84 = scmp.ne.s32.totalorder %s76, %s78
      %p85 = scmp.eq.s32.totalorder %s33, 3
      %p86 = por %p84, %p85
      %p87 = scmp.ne.s32.totalorder %s78, %s79
      %p88 = scmp.eq.s32.totalorder %s33, 0
      %p89 = por %p87, %p88
      %p90 = scmp.ne.s32.totalorder %s78, %s79
      %p91 = scmp.eq.s32.totalorder %s34, 3
      %p92 = por %p90, %p91
      %p94 = scmp.ne.s32.totalorder %s79, %s93
      %p95 = scmp.eq.s32.totalorder %s34, 0
      %p96 = por %p94, %p95
      %s98 = sadd.s32 %s97, 1
      %p101 = scmp.eq.s32.totalorder %s28, 3
      %p102 = scmp.ne.s32.totalorder %s97, %s99
      %p103 = scmp.eq.s32.totalorder %s28, 0
      %p104 = por %p102, %p103
      %p105 = scmp.ne.s32.totalorder %s97, %s99
      %p106 = scmp.eq.s32.totalorder %s33, 3
      %p107 = por %p105, %p106
      %p108 = scmp.ne.s32.totalorder %s99, %s100
      %p109 = scmp.eq.s32.totalorder %s33, 0
      %p110 = por %p108, %p109
      %p111 = scmp.ne.s32.totalorder %s99, %s100
      %p112 = scmp.eq.s32.totalorder %s34, 3
      %p113 = por %p111, %p112
      %p115 = scmp.ne.s32.totalorder %s100, %s114
      %p116 = scmp.eq.s32.totalorder %s34, 0
      %p117 = por %p115, %p116
      %s118 = ssub.s32 %s36, %s43
      %p119 = scmp.eq.s32.totalorder %s118, 0
      %s121 = sadd.s32 %s120, 1
      %s122 = scalar_select %p119, %s120, %s121
      %p125 = pneg %p119
      %p126 = scmp.eq.s32.totalorder %s28, 3
      %p127 = por %p125, %p126
      %p128 = scmp.ne.s32.totalorder %s120, %s123
      %p129 = scmp.eq.s32.totalorder %s28, 0
      %p130 = por %p128, %p129
      %p131 = scmp.ne.s32.totalorder %s120, %s123
      %p132 = scmp.eq.s32.totalorder %s33, 3
      %p133 = por %p131, %p132
      %p134 = scmp.ne.s32.totalorder %s123, %s124
      %p135 = scmp.eq.s32.totalorder %s33, 0
      %p136 = por %p134, %p135
      %p137 = scmp.ne.s32.totalorder %s123, %s124
      %p138 = scmp.eq.s32.totalorder %s34, 3
      %p139 = por %p137, %p138
      %p141 = scmp.ne.s32.totalorder %s124, %s140
      %p142 = scmp.eq.s32.totalorder %s34, 0
      %p143 = por %p141, %p142
      %s144 = ssub.s32 %s36, %s43
      %p145 = scmp.eq.s32.totalorder %s144, 0
      %s147 = sadd.s32 %s146, 1
      %s148 = scalar_select %p145, %s146, %s147
      %p151 = pneg %p145
      %p152 = scmp.eq.s32.totalorder %s28, 3
      %p153 = por %p151, %p152
      %p154 = scmp.ne.s32.totalorder %s146, %s149
      %p155 = scmp.eq.s32.totalorder %s28, 0
      %p156 = por %p154, %p155
      %p157 = scmp.ne.s32.totalorder %s146, %s149
      %p158 = scmp.eq.s32.totalorder %s33, 3
      %p159 = por %p157, %p158
      %p160 = scmp.ne.s32.totalorder %s149, %s150
      %p161 = scmp.eq.s32.totalorder %s33, 0
      %p162 = por %p160, %p161
      %p163 = scmp.ne.s32.totalorder %s149, %s150
      %p164 = scmp.eq.s32.totalorder %s34, 3
      %p165 = por %p163, %p164
      %p167 = scmp.ne.s32.totalorder %s150, %s166
      %p168 = scmp.eq.s32.totalorder %s34, 0
      %p169 = por %p167, %p168
      %s171 = sadd.s32 %s170, 1
      %p174 = scmp.eq.s32.totalorder %s28, 3
      %p175 = scmp.ne.s32.totalorder %s170, %s172
      %p176 = scmp.eq.s32.totalorder %s28, 0
      %p177 = por %p175, %p176
      %p178 = scmp.ne.s32.totalorder %s170, %s172
      %p179 = scmp.eq.s32.totalorder %s33, 3
      %p180 = por %p178, %p179
      %p181 = scmp.ne.s32.totalorder %s172, %s173
      %p182 = scmp.eq.s32.totalorder %s33, 0
      %p183 = por %p181, %p182
      %p184 = scmp.ne.s32.totalorder %s172, %s173
      %p185 = scmp.eq.s32.totalorder %s34, 3
      %p186 = por %p184, %p185
      %p188 = scmp.ne.s32.totalorder %s173, %s187
      %p189 = scmp.eq.s32.totalorder %s34, 0
      %p190 = por %p188, %p189
      %s192 = sadd.s32 %s191, 1
      %p195 = scmp.eq.s32.totalorder %s28, 3
      %p196 = scmp.ne.s32.totalorder %s191, %s193
      %p197 = scmp.eq.s32.totalorder %s28, 0
      %p198 = por %p196, %p197
      %p199 = scmp.ne.s32.totalorder %s191, %s193
      %p200 = scmp.eq.s32.totalorder %s33, 3
      %p201 = por %p199, %p200
      %p202 = scmp.ne.s32.totalorder %s193, %s194
      %p203 = scmp.eq.s32.totalorder %s33, 0
      %p204 = por %p202, %p203
      %p205 = scmp.ne.s32.totalorder %s193, %s194
      %p206 = scmp.eq.s32.totalorder %s34, 3
      %p207 = por %p205, %p206
      %p209 = scmp.ne.s32.totalorder %s194, %s208
      %p210 = scmp.eq.s32.totalorder %s34, 0
      %p211 = por %p209, %p210
      %s213 = sadd.s32 %s212, 1
      %p216 = scmp.eq.s32.totalorder %s28, 3
      %p217 = scmp.ne.s32.totalorder %s212, %s214
      %p218 = scmp.eq.s32.totalorder %s28, 0
      %p219 = por %p217, %p218
      %p220 = scmp.ne.s32.totalorder %s212, %s214
      %p221 = scmp.eq.s32.totalorder %s33, 3
      %p222 = por %p220, %p221
      %p223 = scmp.ne.s32.totalorder %s214, %s215
      %p224 = scmp.eq.s32.totalorder %s33, 0
      %p225 = por %p223, %p224
      %p226 = scmp.ne.s32.totalorder %s214, %s215
      %p227 = scmp.eq.s32.totalorder %s34, 3
      %p228 = por %p226, %p227
      %p230 = scmp.ne.s32.totalorder %s215, %s229
      %p231 = scmp.eq.s32.totalorder %s34, 0
      %p232 = por %p230, %p231
      %s234 = sadd.s32 %s233, 1
      %p237 = scmp.eq.s32.totalorder %s28, 3
      %p238 = scmp.ne.s32.totalorder %s233, %s235
      %p239 = scmp.eq.s32.totalorder %s28, 0
      %p240 = por %p238, %p239
      %p241 = scmp.ne.s32.totalorder %s233, %s235
      %p242 = scmp.eq.s32.totalorder %s33, 3
      %p243 = por %p241, %p242
      %p244 = scmp.ne.s32.totalorder %s235, %s236
      %p245 = scmp.eq.s32.totalorder %s33, 0
      %p246 = por %p244, %p245
      %p247 = scmp.ne.s32.totalorder %s235, %s236
      %p248 = scmp.eq.s32.totalorder %s34, 3
      %p249 = por %p247, %p248
      %p251 = scmp.ne.s32.totalorder %s236, %s250
      %p252 = scmp.eq.s32.totalorder %s34, 0
      %p253 = por %p251, %p252
      %s254 = ssub.s32 %s35, %s47
      %s255 = ssub.s32 %s36, %s43
      %s256 = sor.u32 %s254, %s255
      %p257 = scmp.eq.s32.totalorder %s256, 0
      %s259 = sadd.s32 %s258, 1
      %s260 = scalar_select %p257, %s258, %s259
      %p263 = pneg %p257
      %p264 = scmp.eq.s32.totalorder %s28, 3
      %p265 = por %p263, %p264
      %p266 = scmp.ne.s32.totalorder %s258, %s261
      %p267 = scmp.eq.s32.totalorder %s28, 0
      %p268 = por %p266, %p267
      %p269 = scmp.ne.s32.totalorder %s258, %s261
      %p270 = scmp.eq.s32.totalorder %s33, 3
      %p271 = por %p269, %p270
      %p272 = scmp.ne.s32.totalorder %s261, %s262
      %p273 = scmp.eq.s32.totalorder %s33, 0
      %p274 = por %p272, %p273
      %p275 = scmp.ne.s32.totalorder %s261, %s262
      %p276 = scmp.eq.s32.totalorder %s34, 3
      %p277 = por %p275, %p276
      %p279 = scmp.ne.s32.totalorder %s262, %s278
      %p280 = scmp.eq.s32.totalorder %s34, 0
      %p281 = por %p279, %p280
      %s282 = ssub.s32 %s35, %s47
      %s283 = ssub.s32 %s36, %s43
      %s284 = sor.u32 %s282, %s283
      %p285 = scmp.eq.s32.totalorder %s284, 0
      %s287 = sadd.s32 %s286, 1
      %s288 = scalar_select %p285, %s286, %s287
      %p291 = pneg %p285
      %p292 = scmp.eq.s32.totalorder %s28, 3
      %p293 = por %p291, %p292
      %p294 = scmp.ne.s32.totalorder %s286, %s289
      %p295 = scmp.eq.s32.totalorder %s28, 0
      %p296 = por %p294, %p295
      %p297 = scmp.ne.s32.totalorder %s286, %s289
      %p298 = scmp.eq.s32.totalorder %s33, 3
      %p299 = por %p297, %p298
      %p300 = scmp.ne.s32.totalorder %s289, %s290
      %p301 = scmp.eq.s32.totalorder %s33, 0
      %p302 = por %p300, %p301
      %p303 = scmp.ne.s32.totalorder %s289, %s290
      %p304 = scmp.eq.s32.totalorder %s34, 3
      %p305 = por %p303, %p304
      %p307 = scmp.ne.s32.totalorder %s290, %s306
      %p308 = scmp.eq.s32.totalorder %s34, 0
      %p309 = por %p307, %p308
      %s310 = ssub.s32 %s35, %s47
      %s311 = ssub.s32 %s36, %s43
      %s312 = sor.u32 %s310, %s311
      %p313 = scmp.eq.s32.totalorder %s312, 0
      %s315 = sadd.s32 %s314, 1
      %s316 = scalar_select %p313, %s314, %s315
      %p319 = pneg %p313
      %p320 = scmp.eq.s32.totalorder %s28, 3
      %p321 = por %p319, %p320
      %p322 = scmp.ne.s32.totalorder %s314, %s317
      %p323 = scmp.eq.s32.totalorder %s28, 0
      %p324 = por %p322, %p323
      %p325 = scmp.ne.s32.totalorder %s314, %s317
      %p326 = scmp.eq.s32.totalorder %s33, 3
      %p327 = por %p325, %p326
      %p328 = scmp.ne.s32.totalorder %s317, %s318
      %p329 = scmp.eq.s32.totalorder %s33, 0
      %p330 = por %p328, %p329
      %p331 = scmp.ne.s32.totalorder %s317, %s318
      %p332 = scmp.eq.s32.totalorder %s34, 3
      %p333 = por %p331, %p332
      %p335 = scmp.ne.s32.totalorder %s318, %s334
      %p336 = scmp.eq.s32.totalorder %s34, 0
      %p337 = por %p335, %p336
      %p338 = scmp.le.s32.totalorder 1, %s28
      %p339 = scmp.lt.s32.totalorder %s28, 5
      %p340 = pnand %p338, %p339
      %p341 = pneg %p340
      // Predicated region
      $region9: #{tpu_custom_call.1} parent=5 // pred_check
        _
      $region10: #{tpu_custom_call.1} parent=5 // pred_check_branch
        %343 = sbr.rel (%p340) target = $region12
      $region11: #{tpu_custom_call.1} parent=5 // pred_region
        %s344 = ssub.s32 %s28, 1
        // Predicated region
        $region13: #{tpu_custom_call.1} parent=11 // pred_check
          %p345 = pneg %p89
        $region14: #{tpu_custom_call.1} parent=11 // pred_check_branch
          %347 = sbr.rel (%p345) target = $region16
        $region15: #{tpu_custom_call.1} parent=11 // pred_region
          _
        $region16: #{tpu_custom_call.1} parent=11 // pred_fallthru
          _
        // Predicated region
        $region17: #{tpu_custom_call.1} parent=11 // pred_check
          %p348 = pneg %p110
        $region18: #{tpu_custom_call.1} parent=11 // pred_check_branch
          %350 = sbr.rel (%p348) target = $region20
        $region19: #{tpu_custom_call.1} parent=11 // pred_region
          %352 = vsyncadd [#allocation6], 0
          %s353 = sshll.u32 %s2, 4
          %s354 = int_to_ptr.hbm [resolvable:$true] %s353
          %s355 = sshll.u32 [#allocation5], 4
          %s356 = int_to_ptr.vmem [resolvable:$true] %s355
          %361 = dma.hbm_to_vmem [thread:$0]  %s354, 3072, %s356, [#allocation6], 192, 192, 12
        $region20: #{tpu_custom_call.1} parent=11 // pred_fallthru
          _
        // Predicated region
        $region21: #{tpu_custom_call.1} parent=11 // pred_check
          %p362 = pneg %p183
        $region22: #{tpu_custom_call.1} parent=11 // pred_check_branch
          %364 = sbr.rel (%p362) target = $region24
        $region23: #{tpu_custom_call.1} parent=11 // pred_region
          _
        $region24: #{tpu_custom_call.1} parent=11 // pred_fallthru
          _
        // Predicated region
        $region25: #{tpu_custom_call.1} parent=11 // pred_check
          %p365 = pneg %p204
        $region26: #{tpu_custom_call.1} parent=11 // pred_check_branch
          %367 = sbr.rel (%p365) target = $region28
        $region27: #{tpu_custom_call.1} parent=11 // pred_region
          _
        $region28: #{tpu_custom_call.1} parent=11 // pred_fallthru
          _
        // Predicated region
        $region29: #{tpu_custom_call.1} parent=11 // pred_check
          %p368 = pneg %p225
        $region30: #{tpu_custom_call.1} parent=11 // pred_check_branch
          %370 = sbr.rel (%p368) target = $region32
        $region31: #{tpu_custom_call.1} parent=11 // pred_region
          _
        $region32: #{tpu_custom_call.1} parent=11 // pred_fallthru
          _
        // Predicated region
        $region33: #{tpu_custom_call.1} parent=11 // pred_check
          %p371 = pneg %p246
        $region34: #{tpu_custom_call.1} parent=11 // pred_check_branch
          %373 = sbr.rel (%p371) target = $region36
        $region35: #{tpu_custom_call.1} parent=11 // pred_region
          _
        $region36: #{tpu_custom_call.1} parent=11 // pred_fallthru
          _
      $region12: #{tpu_custom_call.1} parent=5 // pred_fallthru
        _
      %p374 = scmp.lt.s32.totalorder %s28, 4
      // Predicated region
      $region37: #{tpu_custom_call.1} parent=5 // pred_check
        %p375 = pneg %p374
      $region38: #{tpu_custom_call.1} parent=5 // pred_check_branch
        %377 = sbr.rel (%p375) target = $region40
      $region39: #{tpu_custom_call.1} parent=5 // pred_region
        // Predicated region
        $region41: #{tpu_custom_call.1} parent=39 // pred_check
          %p378 = pneg %p62
        $region42: #{tpu_custom_call.1} parent=39 // pred_check_branch
          %380 = sbr.rel (%p378) target = $region44
        $region43: #{tpu_custom_call.1} parent=39 // pred_region
          %s381 = sand.u32 %s28, 1
          %s382 = scalar_lea.sflag [#allocation3], %s381
          %s383 = sand.u32 %s52, 1
          %s384 = smul.addr %s383, 128
          %s385 = scalar_lea.vmem [#allocation2], %s384
          %s386 = smul.u32 16, %s36
          %388 = vsyncadd %s382, 0
          %s389 = smul.addr %s35, 32
          %s390 = sadd.s32 %s386, %s389
          %s391 = smul.addr %s390, 8
          %s392 = scalar_lea.hbm %s0, %s391
          %s393 = sshll.u32 %s392, 4
          %s394 = int_to_ptr.hbm [resolvable:$true] %s393
          %s395 = sshll.u32 %s385, 4
          %s396 = int_to_ptr.vmem [resolvable:$true] %s395
          %401 = dma.hbm_to_vmem [thread:$0]  %s394, 2048, %s396, %s382, 128, 128, 8
        $region44: #{tpu_custom_call.1} parent=39 // pred_fallthru
          _
        // Predicated region
        $region45: #{tpu_custom_call.1} parent=39 // pred_check
          %p402 = pneg %p130
        $region46: #{tpu_custom_call.1} parent=39 // pred_check_branch
          %404 = sbr.rel (%p402) target = $region48
        $region47: #{tpu_custom_call.1} parent=39 // pred_region
          %s405 = sand.u32 %s28, 1
          %s406 = scalar_lea.sflag [#allocation3], %s405
          %s407 = sand.u32 %s120, 1
          %s408 = smul.addr %s407, 128
          %s409 = scalar_lea.vmem [#allocation7], %s408
          %s410 = smul.u32 16, %s36
          %412 = vsyncadd %s406, 0
          %s413 = smul.addr %s410, 8
          %s414 = scalar_lea.hbm %s3, %s413
          %s415 = sshll.u32 %s414, 4
          %s416 = int_to_ptr.hbm [resolvable:$true] %s415
          %s417 = sshll.u32 %s409, 4
          %s418 = int_to_ptr.vmem [resolvable:$true] %s417
          %423 = dma.hbm_to_vmem [thread:$0]  %s416, 2048, %s418, %s406, 128, 128, 8
        $region48: #{tpu_custom_call.1} parent=39 // pred_fallthru
          _
        // Predicated region
        $region49: #{tpu_custom_call.1} parent=39 // pred_check
          %p424 = pneg %p156
        $region50: #{tpu_custom_call.1} parent=39 // pred_check_branch
          %426 = sbr.rel (%p424) target = $region52
        $region51: #{tpu_custom_call.1} parent=39 // pred_region
          %s427 = sand.u32 %s28, 1
          %s428 = scalar_lea.sflag [#allocation3], %s427
          %s429 = sand.u32 %s146, 1
          %s430 = smul.addr %s429, 128
          %s431 = scalar_lea.vmem [#allocation8], %s430
          %s432 = smul.u32 16, %s36
          %434 = vsyncadd %s428, 0
          %s435 = smul.addr %s432, 8
          %s436 = scalar_lea.hbm %s4, %s435
          %s437 = sshll.u32 %s436, 4
          %s438 = int_to_ptr.hbm [resolvable:$true] %s437
          %s439 = sshll.u32 %s431, 4
          %s440 = int_to_ptr.vmem [resolvable:$true] %s439
          %445 = dma.hbm_to_vmem [thread:$0]  %s438, 2048, %s440, %s428, 128, 128, 8
        $region52: #{tpu_custom_call.1} parent=39 // pred_fallthru
          _
      $region40: #{tpu_custom_call.1} parent=5 // pred_fallthru
        _
      %p446 = scmp.le.s32.totalorder 1, %s28
      %p447 = scmp.lt.s32.totalorder %s28, 5
      %p448 = pnand %p446, %p447
      %p449 = pneg %p448
      // Predicated region
      $region53: #{tpu_custom_call.1} parent=5 // pred_check
        _
      $region54: #{tpu_custom_call.1} parent=5 // pred_check_branch
        %451 = sbr.rel (%p448) target = $region56
      $region55: #{tpu_custom_call.1} parent=5 // pred_region
        %s452 = ssub.s32 %s28, 1
        %s453 = sand.u32 %s33, 1
        %s454 = scalar_lea.sflag [#allocation3], %s453
        %s455 = sand.u32 %s55, 1
        %s456 = smul.addr %s455, 128
        %s457 = scalar_lea.vmem [#allocation2], %s456
        // Predicated region
        $region57: #{tpu_custom_call.1} parent=55 // pred_check
          %p458 = pneg %p68
        $region58: #{tpu_custom_call.1} parent=55 // pred_check_branch
          %460 = sbr.rel (%p458) target = $region60
        $region59: #{tpu_custom_call.1} parent=55 // pred_region
          %462 = dma.done %s454, 2048
        $region60: #{tpu_custom_call.1} parent=55 // pred_fallthru
          _
        // Predicated region
        $region61: #{tpu_custom_call.1} parent=55 // pred_check
          %p463 = pneg %p110
        $region62: #{tpu_custom_call.1} parent=55 // pred_check_branch
          %465 = sbr.rel (%p463) target = $region64
        $region63: #{tpu_custom_call.1} parent=55 // pred_region
          %467 = dma.done [#allocation6], 3072
        $region64: #{tpu_custom_call.1} parent=55 // pred_fallthru
          _
        %s468 = sand.u32 %s33, 1
        %s469 = scalar_lea.sflag [#allocation3], %s468
        %s470 = sand.u32 %s123, 1
        %s471 = smul.addr %s470, 128
        %s472 = scalar_lea.vmem [#allocation7], %s471
        // Predicated region
        $region65: #{tpu_custom_call.1} parent=55 // pred_check
          %p473 = pneg %p136
        $region66: #{tpu_custom_call.1} parent=55 // pred_check_branch
          %475 = sbr.rel (%p473) target = $region68
        $region67: #{tpu_custom_call.1} parent=55 // pred_region
          %477 = dma.done %s469, 2048
        $region68: #{tpu_custom_call.1} parent=55 // pred_fallthru
          _
        %s478 = sand.u32 %s33, 1
        %s479 = scalar_lea.sflag [#allocation3], %s478
        %s480 = sand.u32 %s149, 1
        %s481 = smul.addr %s480, 128
        %s482 = scalar_lea.vmem [#allocation8], %s481
        // Predicated region
        $region69: #{tpu_custom_call.1} parent=55 // pred_check
          %p483 = pneg %p162
        $region70: #{tpu_custom_call.1} parent=55 // pred_check_branch
          %485 = sbr.rel (%p483) target = $region72
        $region71: #{tpu_custom_call.1} parent=55 // pred_region
          %487 = dma.done %s479, 2048
        $region72: #{tpu_custom_call.1} parent=55 // pred_fallthru
          _
        %s488 = sand.u32 %s33, 1
        %s489 = scalar_lea.sflag [#allocation3], %s488
        %s490 = sand.u32 %s55, 1
        %s491 = smul.addr %s490, 128
        %s492 = scalar_lea.vmem [#allocation2], %s491
        %p493 = pneg %p68
        %p494 = pneg %p65
        %p495 = pneg %p89
        %p496 = pneg %p86
        %p497 = pneg %p110
        %p498 = pneg %p107
        %s499 = sand.u32 %s33, 1
        %s500 = scalar_lea.sflag [#allocation3], %s499
        %s501 = sand.u32 %s123, 1
        %s502 = smul.addr %s501, 128
        %s503 = scalar_lea.vmem [#allocation7], %s502
        %p504 = pneg %p136
        %p505 = pneg %p133
        %s506 = sand.u32 %s33, 1
        %s507 = scalar_lea.sflag [#allocation3], %s506
        %s508 = sand.u32 %s149, 1
        %s509 = smul.addr %s508, 128
        %s510 = scalar_lea.vmem [#allocation8], %s509
        %p511 = pneg %p162
        %p512 = pneg %p159
        %p513 = pneg %p183
        %p514 = pneg %p180
        %p515 = pneg %p204
        %p516 = pneg %p201
        %p517 = pneg %p225
        %p518 = pneg %p222
        %p519 = pneg %p246
        %p520 = pneg %p243
        %p521 = pneg %p274
        %p522 = pneg %p271
        %s523 = sand.u32 %s261, 1
        %s524 = scalar_lea.sflag [#allocation4], %s523
        %s525 = sand.u32 %s261, 1
        %s526 = smul.addr %s525, 64
        %s527 = scalar_lea.vmem [#allocation9], %s526
        %p528 = pneg %p302
        %p529 = pneg %p299
        %s530 = sand.u32 %s33, 1
        %s531 = scalar_lea.sflag [#allocation11], %s530
        %s532 = sand.u32 %s289, 1
        %s533 = smul.addr %s532, 64
        %s534 = scalar_lea.vmem [#allocation10], %s533
        %p535 = pneg %p330
        %p536 = pneg %p327
        %s537 = sand.u32 %s33, 1
        %s538 = scalar_lea.sflag [#allocation11], %s537
        %s539 = sand.u32 %s317, 1
        %s540 = smul.addr %s539, 64
        %s541 = scalar_lea.vmem [#allocation12], %s540
        %s542 = smul.u32 16, %s38
        %s543 = smul.u32 16, %s38
        %s544 = smul.u32 16, %s38
        %s545 = smul.u32 16, %s38
        %s546 = smul.u32 16, %s38
        %s547 = smul.u32 16, %s38
        %v548 = vld [vmem:[%s457] sm:$0xff]
        %v549 = vld [vmem:[%s457 + $0x8] sm:$0xff]
        %v550 = vld [vmem:[%s457 + $0x10] sm:$0xff]
        %v551 = vld [vmem:[%s457 + $0x18] sm:$0xff]
        %v552 = vld [vmem:[%s457 + $0x20] sm:$0xff]
        %v553 = vld [vmem:[%s457 + $0x28] sm:$0xff]
        %v554 = vld [vmem:[%s457 + $0x30] sm:$0xff]
        %v555 = vld [vmem:[%s457 + $0x38] sm:$0xff]
        %v556 = vld [vmem:[%s457 + $0x40] sm:$0xff]
        %v557 = vld [vmem:[%s457 + $0x48] sm:$0xff]
        %v558 = vld [vmem:[%s457 + $0x50] sm:$0xff]
        %v559 = vld [vmem:[%s457 + $0x58] sm:$0xff]
        %v560 = vld [vmem:[%s457 + $0x60] sm:$0xff]
        %v561 = vld [vmem:[%s457 + $0x68] sm:$0xff]
        %v562 = vld [vmem:[%s457 + $0x70] sm:$0xff]
        %v563 = vld [vmem:[%s457 + $0x78] sm:$0xff]
        %v564 = vpack.c.bf16 %v549, %v548
        %v565 = vpack.c.bf16 %v551, %v550
        %v566 = vpack.c.bf16 %v553, %v552
        %v567 = vpack.c.bf16 %v555, %v554
        %v568 = vpack.c.bf16 %v557, %v556
        %v569 = vpack.c.bf16 %v559, %v558
        %v570 = vpack.c.bf16 %v561, %v560
        %v571 = vpack.c.bf16 %v563, %v562
        %v572 = vld [vmem:[%s1] sm:$0xff]
        %v573 = vld [vmem:[%s1 + $0x8] sm:$0xff]
        %v574 = vld [vmem:[%s1 + $0x10] sm:$0xff]
        %v575 = vld [vmem:[%s1 + $0x18] sm:$0xff]
        %v576 = vld [vmem:[%s1 + $0x20] sm:$0xff]
        %v577 = vld [vmem:[%s1 + $0x28] sm:$0xff]
        %v578 = vld [vmem:[%s1 + $0x30] sm:$0xff]
        %v579 = vld [vmem:[%s1 + $0x38] sm:$0xff]
        %v580 = vld [vmem:[%s1 + $0x40] sm:$0xff]
        %v581 = vld [vmem:[%s1 + $0x48] sm:$0xff]
        %v582 = vld [vmem:[%s1 + $0x50] sm:$0xff]
        %v583 = vld [vmem:[%s1 + $0x58] sm:$0xff]
        %v584 = vld [vmem:[%s1 + $0x60] sm:$0xff]
        %v585 = vld [vmem:[%s1 + $0x68] sm:$0xff]
        %v586 = vld [vmem:[%s1 + $0x70] sm:$0xff]
        %v587 = vld [vmem:[%s1 + $0x78] sm:$0xff]
        %v604 = vunpack.c.l.b16 %v572
        %v605 = vunpack.c.h.b16 %v572
        %v606 = vunpack.c.l.b16 %v573
        %v607 = vunpack.c.h.b16 %v573
        %v608 = vunpack.c.l.b16 %v574
        %v609 = vunpack.c.h.b16 %v574
        %v610 = vunpack.c.l.b16 %v575
        %v611 = vunpack.c.h.b16 %v575
        %v612 = vunpack.c.l.b16 %v576
        %v613 = vunpack.c.h.b16 %v576
        %v614 = vunpack.c.l.b16 %v577
        %v615 = vunpack.c.h.b16 %v577
        %v616 = vunpack.c.l.b16 %v578
        %v617 = vunpack.c.h.b16 %v578
        %v618 = vunpack.c.l.b16 %v579
        %v619 = vunpack.c.h.b16 %v579
        %v620 = vunpack.c.l.b16 %v580
        %v621 = vunpack.c.h.b16 %v580
        %v622 = vunpack.c.l.b16 %v581
        %v623 = vunpack.c.h.b16 %v581
        %v624 = vunpack.c.l.b16 %v582
        %v625 = vunpack.c.h.b16 %v582
        %v626 = vunpack.c.l.b16 %v583
        %v627 = vunpack.c.h.b16 %v583
        %v628 = vunpack.c.l.b16 %v584
        %v629 = vunpack.c.h.b16 %v584
        %v630 = vunpack.c.l.b16 %v585
        %v631 = vunpack.c.h.b16 %v585
        %v632 = vunpack.c.l.b16 %v586
        %v633 = vunpack.c.h.b16 %v586
        %v634 = vunpack.c.l.b16 %v587
        %v635 = vunpack.c.h.b16 %v587
        %v636 = vpack.c.b16 %v606, %v604
        %v637 = vpack.c.b16 %v607, %v605
        %v638 = vpack.c.b16 %v610, %v608
        %v639 = vpack.c.b16 %v611, %v609
        %v640 = vpack.c.b16 %v614, %v612
        %v641 = vpack.c.b16 %v615, %v613
        %v642 = vpack.c.b16 %v618, %v616
        %v643 = vpack.c.b16 %v619, %v617
        %v644 = vpack.c.b16 %v622, %v620
        %v645 = vpack.c.b16 %v623, %v621
        %v646 = vpack.c.b16 %v626, %v624
        %v647 = vpack.c.b16 %v627, %v625
        %v648 = vpack.c.b16 %v630, %v628
        %v649 = vpack.c.b16 %v631, %v629
        %v650 = vpack.c.b16 %v634, %v632
        %v651 = vpack.c.b16 %v635, %v633
        %668 = vmatpush.bf16.msra.mxu0 %v650
        %669 = vmatpush.bf16.msra.mxu0 %v648
        %670 = vmatpush.bf16.msra.mxu0 %v646
        %671 = vmatpush.bf16.msra.mxu0 %v644
        %672 = vmatpush.bf16.msra.mxu0 %v642
        %673 = vmatpush.bf16.msra.mxu0 %v640
        %674 = vmatpush.bf16.msra.mxu0 %v638
        %675 = vmatpush.bf16.msra.mxu0 %v636
        %676 = vmatmul.bf16.gmra.mxu0 %v564
        %v677 = vpop.f32.mrf.mxu0
        %v678 = vadd.f32 0.0, %v677
        %v679 = vpop.f32.mrf.mxu0
        %v680 = vadd.f32 0.0, %v679
        %681 = vmatmul.bf16.gmra.mxu0 %v565
        %v682 = vpop.f32.mrf.mxu0
        %v683 = vadd.f32 0.0, %v682
        %v684 = vpop.f32.mrf.mxu0
        %v685 = vadd.f32 0.0, %v684
        %686 = vmatmul.bf16.gmra.mxu0 %v566
        %v687 = vpop.f32.mrf.mxu0
        %v688 = vadd.f32 0.0, %v687
        %v689 = vpop.f32.mrf.mxu0
        %v690 = vadd.f32 0.0, %v689
        %691 = vmatmul.bf16.gmra.mxu0 %v567
        %v692 = vpop.f32.mrf.mxu0
        %v693 = vadd.f32 0.0, %v692
        %v694 = vpop.f32.mrf.mxu0
        %v695 = vadd.f32 0.0, %v694
        %696 = vmatmul.bf16.gmra.mxu0 %v568
        %v697 = vpop.f32.mrf.mxu0
        %v698 = vadd.f32 0.0, %v697
        %v699 = vpop.f32.mrf.mxu0
        %v700 = vadd.f32 0.0, %v699
        %701 = vmatmul.bf16.gmra.mxu0 %v569
        %v702 = vpop.f32.mrf.mxu0
        %v703 = vadd.f32 0.0, %v702
        %v704 = vpop.f32.mrf.mxu0
        %v705 = vadd.f32 0.0, %v704
        %706 = vmatmul.bf16.gmra.mxu0 %v570
        %v707 = vpop.f32.mrf.mxu0
        %v708 = vadd.f32 0.0, %v707
        %v709 = vpop.f32.mrf.mxu0
        %v710 = vadd.f32 0.0, %v709
        %711 = vmatmul.bf16.gmra.mxu0 %v571
        %v712 = vpop.f32.mrf.mxu0
        %v713 = vadd.f32 0.0, %v712
        %v714 = vpop.f32.mrf.mxu0
        %v715 = vadd.f32 0.0, %v714
        %716 = vdwg.mxu0
        %717 = vmatpush.bf16.msra.mxu0 %v651
        %718 = vmatpush.bf16.msra.mxu0 %v649
        %719 = vmatpush.bf16.msra.mxu0 %v647
        %720 = vmatpush.bf16.msra.mxu0 %v645
        %721 = vmatpush.bf16.msra.mxu0 %v643
        %722 = vmatpush.bf16.msra.mxu0 %v641
        %723 = vmatpush.bf16.msra.mxu0 %v639
        %724 = vmatpush.bf16.msra.mxu0 %v637
        %725 = vmatmul.bf16.gmra.mxu0 %v564
        %v726 = vpop.f32.mrf.mxu0
        %v727 = vadd.f32 0.0, %v726
        %v728 = vpop.f32.mrf.mxu0
        %v729 = vadd.f32 0.0, %v728
        %730 = vmatmul.bf16.gmra.mxu0 %v565
        %v731 = vpop.f32.mrf.mxu0
        %v732 = vadd.f32 0.0, %v731
        %v733 = vpop.f32.mrf.mxu0
        %v734 = vadd.f32 0.0, %v733
        %735 = vmatmul.bf16.gmra.mxu0 %v566
        %v736 = vpop.f32.mrf.mxu0
        %v737 = vadd.f32 0.0, %v736
        %v738 = vpop.f32.mrf.mxu0
        %v739 = vadd.f32 0.0, %v738
        %740 = vmatmul.bf16.gmra.mxu0 %v567
        %v741 = vpop.f32.mrf.mxu0
        %v742 = vadd.f32 0.0, %v741
        %v743 = vpop.f32.mrf.mxu0
        %v744 = vadd.f32 0.0, %v743
        %745 = vmatmul.bf16.gmra.mxu0 %v568
        %v746 = vpop.f32.mrf.mxu0
        %v747 = vadd.f32 0.0, %v746
        %v748 = vpop.f32.mrf.mxu0
        %v749 = vadd.f32 0.0, %v748
        %750 = vmatmul.bf16.gmra.mxu0 %v569
        %v751 = vpop.f32.mrf.mxu0
        %v752 = vadd.f32 0.0, %v751
        %v753 = vpop.f32.mrf.mxu0
        %v754 = vadd.f32 0.0, %v753
        %755 = vmatmul.bf16.gmra.mxu0 %v570
        %v756 = vpop.f32.mrf.mxu0
        %v757 = vadd.f32 0.0, %v756
        %v758 = vpop.f32.mrf.mxu0
        %v759 = vadd.f32 0.0, %v758
        %760 = vmatmul.bf16.gmra.mxu0 %v571
        %v761 = vpop.f32.mrf.mxu0
        %v762 = vadd.f32 0.0, %v761
        %v763 = vpop.f32.mrf.mxu0
        %v764 = vadd.f32 0.0, %v763
        %765 = vdwg.mxu0
        %v766 = vld [vmem:[%s472] sm:$0xff]
        %v767 = vld [vmem:[%s472 + $0x8] sm:$0xff]
        %v768 = vld [vmem:[%s472 + $0x10] sm:$0xff]
        %v769 = vld [vmem:[%s472 + $0x18] sm:$0xff]
        %v770 = vld [vmem:[%s472 + $0x20] sm:$0xff]
        %v771 = vld [vmem:[%s472 + $0x28] sm:$0xff]
        %v772 = vld [vmem:[%s472 + $0x30] sm:$0xff]
        %v773 = vld [vmem:[%s472 + $0x38] sm:$0xff]
        %v774 = vld [vmem:[%s472 + $0x40] sm:$0xff]
        %v775 = vld [vmem:[%s472 + $0x48] sm:$0xff]
        %v776 = vld [vmem:[%s472 + $0x50] sm:$0xff]
        %v777 = vld [vmem:[%s472 + $0x58] sm:$0xff]
        %v778 = vld [vmem:[%s472 + $0x60] sm:$0xff]
        %v779 = vld [vmem:[%s472 + $0x68] sm:$0xff]
        %v780 = vld [vmem:[%s472 + $0x70] sm:$0xff]
        %v781 = vld [vmem:[%s472 + $0x78] sm:$0xff]
        %v782 = vmul.f32 %v678, %v766
        %v783 = vmul.f32 %v680, %v767
        %v784 = vmul.f32 %v683, %v768
        %v785 = vmul.f32 %v685, %v769
        %v786 = vmul.f32 %v688, %v770
        %v787 = vmul.f32 %v690, %v771
        %v788 = vmul.f32 %v693, %v772
        %v789 = vmul.f32 %v695, %v773
        %v790 = vmul.f32 %v698, %v774
        %v791 = vmul.f32 %v700, %v775
        %v792 = vmul.f32 %v703, %v776
        %v793 = vmul.f32 %v705, %v777
        %v794 = vmul.f32 %v708, %v778
        %v795 = vmul.f32 %v710, %v779
        %v796 = vmul.f32 %v713, %v780
        %v797 = vmul.f32 %v715, %v781
        %v798 = vld [vmem:[%s482] sm:$0xff]
        %v799 = vld [vmem:[%s482 + $0x8] sm:$0xff]
        %v800 = vld [vmem:[%s482 + $0x10] sm:$0xff]
        %v801 = vld [vmem:[%s482 + $0x18] sm:$0xff]
        %v802 = vld [vmem:[%s482 + $0x20] sm:$0xff]
        %v803 = vld [vmem:[%s482 + $0x28] sm:$0xff]
        %v804 = vld [vmem:[%s482 + $0x30] sm:$0xff]
        %v805 = vld [vmem:[%s482 + $0x38] sm:$0xff]
        %v806 = vld [vmem:[%s482 + $0x40] sm:$0xff]
        %v807 = vld [vmem:[%s482 + $0x48] sm:$0xff]
        %v808 = vld [vmem:[%s482 + $0x50] sm:$0xff]
        %v809 = vld [vmem:[%s482 + $0x58] sm:$0xff]
        %v810 = vld [vmem:[%s482 + $0x60] sm:$0xff]
        %v811 = vld [vmem:[%s482 + $0x68] sm:$0xff]
        %v812 = vld [vmem:[%s482 + $0x70] sm:$0xff]
        %v813 = vld [vmem:[%s482 + $0x78] sm:$0xff]
        %v814 = vmul.f32 %v727, %v798
        %v815 = vmul.f32 %v729, %v799
        %v816 = vmul.f32 %v732, %v800
        %v817 = vmul.f32 %v734, %v801
        %v818 = vmul.f32 %v737, %v802
        %v819 = vmul.f32 %v739, %v803
        %v820 = vmul.f32 %v742, %v804
        %v821 = vmul.f32 %v744, %v805
        %v822 = vmul.f32 %v747, %v806
        %v823 = vmul.f32 %v749, %v807
        %v824 = vmul.f32 %v752, %v808
        %v825 = vmul.f32 %v754, %v809
        %v826 = vmul.f32 %v757, %v810
        %v827 = vmul.f32 %v759, %v811
        %v828 = vmul.f32 %v762, %v812
        %v829 = vmul.f32 %v764, %v813
        %v830 = vadd.f32 %v782, %v814
        %v831 = vadd.f32 %v783, %v815
        %v832 = vadd.f32 %v784, %v816
        %v833 = vadd.f32 %v785, %v817
        %v834 = vadd.f32 %v786, %v818
        %v835 = vadd.f32 %v787, %v819
        %v836 = vadd.f32 %v788, %v820
        %v837 = vadd.f32 %v789, %v821
        %v838 = vadd.f32 %v790, %v822
        %v839 = vadd.f32 %v791, %v823
        %v840 = vadd.f32 %v792, %v824
        %v841 = vadd.f32 %v793, %v825
        %v842 = vadd.f32 %v794, %v826
        %v843 = vadd.f32 %v795, %v827
        %v844 = vadd.f32 %v796, %v828
        %v845 = vadd.f32 %v797, %v829
        %v846 = vxor.u32 %v830, 2147483648
        %v847 = vxor.u32 %v831, 2147483648
        %v848 = vxor.u32 %v832, 2147483648
        %v849 = vxor.u32 %v833, 2147483648
        %v850 = vxor.u32 %v834, 2147483648
        %v851 = vxor.u32 %v835, 2147483648
        %v852 = vxor.u32 %v836, 2147483648
        %v853 = vxor.u32 %v837, 2147483648
        %v854 = vxor.u32 %v838, 2147483648
        %v855 = vxor.u32 %v839, 2147483648
        %v856 = vxor.u32 %v840, 2147483648
        %v857 = vxor.u32 %v841, 2147483648
        %v858 = vxor.u32 %v842, 2147483648
        %v859 = vxor.u32 %v843, 2147483648
        %v860 = vxor.u32 %v844, 2147483648
        %v861 = vxor.u32 %v845, 2147483648
        %v862 = vmul.f32 %v846, 1.442695
        %v863 = vpow.pop %v862
        %v864 = vmul.f32 %v847, 1.442695
        %v865 = vpow.pop %v864
        %v866 = vmul.f32 %v848, 1.442695
        %v867 = vpow.pop %v866
        %v868 = vmul.f32 %v849, 1.442695
        %v869 = vpow.pop %v868
        %v870 = vmul.f32 %v850, 1.442695
        %v871 = vpow.pop %v870
        %v872 = vmul.f32 %v851, 1.442695
        %v873 = vpow.pop %v872
        %v874 = vmul.f32 %v852, 1.442695
        %v875 = vpow.pop %v874
        %v876 = vmul.f32 %v853, 1.442695
        %v877 = vpow.pop %v876
        %v878 = vmul.f32 %v854, 1.442695
        %v879 = vpow.pop %v878
        %v880 = vmul.f32 %v855, 1.442695
        %v881 = vpow.pop %v880
        %v882 = vmul.f32 %v856, 1.442695
        %v883 = vpow.pop %v882
        %v884 = vmul.f32 %v857, 1.442695
        %v885 = vpow.pop %v884
        %v886 = vmul.f32 %v858, 1.442695
        %v887 = vpow.pop %v886
        %v888 = vmul.f32 %v859, 1.442695
        %v889 = vpow.pop %v888
        %v890 = vmul.f32 %v860, 1.442695
        %v891 = vpow.pop %v890
        %v892 = vmul.f32 %v861, 1.442695
        %v893 = vpow.pop %v892
        %v894 = vadd.f32 %v863, 1.0
        %v895 = vadd.f32 %v865, 1.0
        %v896 = vadd.f32 %v867, 1.0
        %v897 = vadd.f32 %v869, 1.0
        %v898 = vadd.f32 %v871, 1.0
        %v899 = vadd.f32 %v873, 1.0
        %v900 = vadd.f32 %v875, 1.0
        %v901 = vadd.f32 %v877, 1.0
        %v902 = vadd.f32 %v879, 1.0
        %v903 = vadd.f32 %v881, 1.0
        %v904 = vadd.f32 %v883, 1.0
        %v905 = vadd.f32 %v885, 1.0
        %v906 = vadd.f32 %v887, 1.0
        %v907 = vadd.f32 %v889, 1.0
        %v908 = vadd.f32 %v891, 1.0
        %v909 = vadd.f32 %v893, 1.0
        %v910 = vrcp.pop %v894
        %v911 = vmul.f32 %v894, %v910
        %v912 = vsub.f32 1.0, %v911
        %v913 = vmul.f32 %v910, %v912
        %v914 = vadd.f32 %v910, %v913
        %vm915 = vweird.f32 %v894
        %vm916 = vweird.f32 %v910
        %vm917 = vmor %vm915, %vm916
        %v918 = vsel %vm917, %v910, %v914
        %v919 = vand.u32 2147483647, %v894
        %vm920 = vcmp.eq.f32.partialorder %v919, 8.507059e+37
        %v921 = vand.u32 %v894, 2147483648
        %v922 = vor.u32 1.1754944e-38, %v921
        %v923 = vsel %vm920, %v922, %v918
        %v924 = vmul.f32 1.0, %v923
        %v925 = vrcp.pop %v895
        %v926 = vmul.f32 %v895, %v925
        %v927 = vsub.f32 1.0, %v926
        %v928 = vmul.f32 %v925, %v927
        %v929 = vadd.f32 %v925, %v928
        %vm930 = vweird.f32 %v895
        %vm931 = vweird.f32 %v925
        %vm932 = vmor %vm930, %vm931
        %v933 = vsel %vm932, %v925, %v929
        %v934 = vand.u32 2147483647, %v895
        %vm935 = vcmp.eq.f32.partialorder %v934, 8.507059e+37
        %v936 = vand.u32 %v895, 2147483648
        %v937 = vor.u32 1.1754944e-38, %v936
        %v938 = vsel %vm935, %v937, %v933
        %v939 = vmul.f32 1.0, %v938
        %v940 = vrcp.pop %v896
        %v941 = vmul.f32 %v896, %v940
        %v942 = vsub.f32 1.0, %v941
        %v943 = vmul.f32 %v940, %v942
        %v944 = vadd.f32 %v940, %v943
        %vm945 = vweird.f32 %v896
        %vm946 = vweird.f32 %v940
        %vm947 = vmor %vm945, %vm946
        %v948 = vsel %vm947, %v940, %v944
        %v949 = vand.u32 2147483647, %v896
        %vm950 = vcmp.eq.f32.partialorder %v949, 8.507059e+37
        %v951 = vand.u32 %v896, 2147483648
        %v952 = vor.u32 1.1754944e-38, %v951
        %v953 = vsel %vm950, %v952, %v948
        %v954 = vmul.f32 1.0, %v953
        %v955 = vrcp.pop %v897
        %v956 = vmul.f32 %v897, %v955
        %v957 = vsub.f32 1.0, %v956
        %v958 = vmul.f32 %v955, %v957
        %v959 = vadd.f32 %v955, %v958
        %vm960 = vweird.f32 %v897
        %vm961 = vweird.f32 %v955
        %vm962 = vmor %vm960, %vm961
        %v963 = vsel %vm962, %v955, %v959
        %v964 = vand.u32 2147483647, %v897
        %vm965 = vcmp.eq.f32.partialorder %v964, 8.507059e+37
        %v966 = vand.u32 %v897, 2147483648
        %v967 = vor.u32 1.1754944e-38, %v966
        %v968 = vsel %vm965, %v967, %v963
        %v969 = vmul.f32 1.0, %v968
        %v970 = vrcp.pop %v898
        %v971 = vmul.f32 %v898, %v970
        %v972 = vsub.f32 1.0, %v971
        %v973 = vmul.f32 %v970, %v972
        %v974 = vadd.f32 %v970, %v973
        %vm975 = vweird.f32 %v898
        %vm976 = vweird.f32 %v970
        %vm977 = vmor %vm975, %vm976
        %v978 = vsel %vm977, %v970, %v974
        %v979 = vand.u32 2147483647, %v898
        %vm980 = vcmp.eq.f32.partialorder %v979, 8.507059e+37
        %v981 = vand.u32 %v898, 2147483648
        %v982 = vor.u32 1.1754944e-38, %v981
        %v983 = vsel %vm980, %v982, %v978
        %v984 = vmul.f32 1.0, %v983
        %v985 = vrcp.pop %v899
        %v986 = vmul.f32 %v899, %v985
        %v987 = vsub.f32 1.0, %v986
        %v988 = vmul.f32 %v985, %v987
        %v989 = vadd.f32 %v985, %v988
        %vm990 = vweird.f32 %v899
        %vm991 = vweird.f32 %v985
        %vm992 = vmor %vm990, %vm991
        %v993 = vsel %vm992, %v985, %v989
        %v994 = vand.u32 2147483647, %v899
        %vm995 = vcmp.eq.f32.partialorder %v994, 8.507059e+37
        %v996 = vand.u32 %v899, 2147483648
        %v997 = vor.u32 1.1754944e-38, %v996
        %v998 = vsel %vm995, %v997, %v993
        %v999 = vmul.f32 1.0, %v998
        %v1000 = vrcp.pop %v900
        %v1001 = vmul.f32 %v900, %v1000
        %v1002 = vsub.f32 1.0, %v1001
        %v1003 = vmul.f32 %v1000, %v1002
        %v1004 = vadd.f32 %v1000, %v1003
        %vm1005 = vweird.f32 %v900
        %vm1006 = vweird.f32 %v1000
        %vm1007 = vmor %vm1005, %vm1006
        %v1008 = vsel %vm1007, %v1000, %v1004
        %v1009 = vand.u32 2147483647, %v900
        %vm1010 = vcmp.eq.f32.partialorder %v1009, 8.507059e+37
        %v1011 = vand.u32 %v900, 2147483648
        %v1012 = vor.u32 1.1754944e-38, %v1011
        %v1013 = vsel %vm1010, %v1012, %v1008
        %v1014 = vmul.f32 1.0, %v1013
        %v1015 = vrcp.pop %v901
        %v1016 = vmul.f32 %v901, %v1015
        %v1017 = vsub.f32 1.0, %v1016
        %v1018 = vmul.f32 %v1015, %v1017
        %v1019 = vadd.f32 %v1015, %v1018
        %vm1020 = vweird.f32 %v901
        %vm1021 = vweird.f32 %v1015
        %vm1022 = vmor %vm1020, %vm1021
        %v1023 = vsel %vm1022, %v1015, %v1019
        %v1024 = vand.u32 2147483647, %v901
        %vm1025 = vcmp.eq.f32.partialorder %v1024, 8.507059e+37
        %v1026 = vand.u32 %v901, 2147483648
        %v1027 = vor.u32 1.1754944e-38, %v1026
        %v1028 = vsel %vm1025, %v1027, %v1023
        %v1029 = vmul.f32 1.0, %v1028
        %v1030 = vrcp.pop %v902
        %v1031 = vmul.f32 %v902, %v1030
        %v1032 = vsub.f32 1.0, %v1031
        %v1033 = vmul.f32 %v1030, %v1032
        %v1034 = vadd.f32 %v1030, %v1033
        %vm1035 = vweird.f32 %v902
        %vm1036 = vweird.f32 %v1030
        %vm1037 = vmor %vm1035, %vm1036
        %v1038 = vsel %vm1037, %v1030, %v1034
        %v1039 = vand.u32 2147483647, %v902
        %vm1040 = vcmp.eq.f32.partialorder %v1039, 8.507059e+37
        %v1041 = vand.u32 %v902, 2147483648
        %v1042 = vor.u32 1.1754944e-38, %v1041
        %v1043 = vsel %vm1040, %v1042, %v1038
        %v1044 = vmul.f32 1.0, %v1043
        %v1045 = vrcp.pop %v903
        %v1046 = vmul.f32 %v903, %v1045
        %v1047 = vsub.f32 1.0, %v1046
        %v1048 = vmul.f32 %v1045, %v1047
        %v1049 = vadd.f32 %v1045, %v1048
        %vm1050 = vweird.f32 %v903
        %vm1051 = vweird.f32 %v1045
        %vm1052 = vmor %vm1050, %vm1051
        %v1053 = vsel %vm1052, %v1045, %v1049
        %v1054 = vand.u32 2147483647, %v903
        %vm1055 = vcmp.eq.f32.partialorder %v1054, 8.507059e+37
        %v1056 = vand.u32 %v903, 2147483648
        %v1057 = vor.u32 1.1754944e-38, %v1056
        %v1058 = vsel %vm1055, %v1057, %v1053
        %v1059 = vmul.f32 1.0, %v1058
        %v1060 = vrcp.pop %v904
        %v1061 = vmul.f32 %v904, %v1060
        %v1062 = vsub.f32 1.0, %v1061
        %v1063 = vmul.f32 %v1060, %v1062
        %v1064 = vadd.f32 %v1060, %v1063
        %vm1065 = vweird.f32 %v904
        %vm1066 = vweird.f32 %v1060
        %vm1067 = vmor %vm1065, %vm1066
        %v1068 = vsel %vm1067, %v1060, %v1064
        %v1069 = vand.u32 2147483647, %v904
        %vm1070 = vcmp.eq.f32.partialorder %v1069, 8.507059e+37
        %v1071 = vand.u32 %v904, 2147483648
        %v1072 = vor.u32 1.1754944e-38, %v1071
        %v1073 = vsel %vm1070, %v1072, %v1068
        %v1074 = vmul.f32 1.0, %v1073
        %v1075 = vrcp.pop %v905
        %v1076 = vmul.f32 %v905, %v1075
        %v1077 = vsub.f32 1.0, %v1076
        %v1078 = vmul.f32 %v1075, %v1077
        %v1079 = vadd.f32 %v1075, %v1078
        %vm1080 = vweird.f32 %v905
        %vm1081 = vweird.f32 %v1075
        %vm1082 = vmor %vm1080, %vm1081
        %v1083 = vsel %vm1082, %v1075, %v1079
        %v1084 = vand.u32 2147483647, %v905
        %vm1085 = vcmp.eq.f32.partialorder %v1084, 8.507059e+37
        %v1086 = vand.u32 %v905, 2147483648
        %v1087 = vor.u32 1.1754944e-38, %v1086
        %v1088 = vsel %vm1085, %v1087, %v1083
        %v1089 = vmul.f32 1.0, %v1088
        %v1090 = vrcp.pop %v906
        %v1091 = vmul.f32 %v906, %v1090
        %v1092 = vsub.f32 1.0, %v1091
        %v1093 = vmul.f32 %v1090, %v1092
        %v1094 = vadd.f32 %v1090, %v1093
        %vm1095 = vweird.f32 %v906
        %vm1096 = vweird.f32 %v1090
        %vm1097 = vmor %vm1095, %vm1096
        %v1098 = vsel %vm1097, %v1090, %v1094
        %v1099 = vand.u32 2147483647, %v906
        %vm1100 = vcmp.eq.f32.partialorder %v1099, 8.507059e+37
        %v1101 = vand.u32 %v906, 2147483648
        %v1102 = vor.u32 1.1754944e-38, %v1101
        %v1103 = vsel %vm1100, %v1102, %v1098
        %v1104 = vmul.f32 1.0, %v1103
        %v1105 = vrcp.pop %v907
        %v1106 = vmul.f32 %v907, %v1105
        %v1107 = vsub.f32 1.0, %v1106
        %v1108 = vmul.f32 %v1105, %v1107
        %v1109 = vadd.f32 %v1105, %v1108
        %vm1110 = vweird.f32 %v907
        %vm1111 = vweird.f32 %v1105
        %vm1112 = vmor %vm1110, %vm1111
        %v1113 = vsel %vm1112, %v1105, %v1109
        %v1114 = vand.u32 2147483647, %v907
        %vm1115 = vcmp.eq.f32.partialorder %v1114, 8.507059e+37
        %v1116 = vand.u32 %v907, 2147483648
        %v1117 = vor.u32 1.1754944e-38, %v1116
        %v1118 = vsel %vm1115, %v1117, %v1113
        %v1119 = vmul.f32 1.0, %v1118
        %v1120 = vrcp.pop %v908
        %v1121 = vmul.f32 %v908, %v1120
        %v1122 = vsub.f32 1.0, %v1121
        %v1123 = vmul.f32 %v1120, %v1122
        %v1124 = vadd.f32 %v1120, %v1123
        %vm1125 = vweird.f32 %v908
        %vm1126 = vweird.f32 %v1120
        %vm1127 = vmor %vm1125, %vm1126
        %v1128 = vsel %vm1127, %v1120, %v1124
        %v1129 = vand.u32 2147483647, %v908
        %vm1130 = vcmp.eq.f32.partialorder %v1129, 8.507059e+37
        %v1131 = vand.u32 %v908, 2147483648
        %v1132 = vor.u32 1.1754944e-38, %v1131
        %v1133 = vsel %vm1130, %v1132, %v1128
        %v1134 = vmul.f32 1.0, %v1133
        %v1135 = vrcp.pop %v909
        %v1136 = vmul.f32 %v909, %v1135
        %v1137 = vsub.f32 1.0, %v1136
        %v1138 = vmul.f32 %v1135, %v1137
        %v1139 = vadd.f32 %v1135, %v1138
        %vm1140 = vweird.f32 %v909
        %vm1141 = vweird.f32 %v1135
        %vm1142 = vmor %vm1140, %vm1141
        %v1143 = vsel %vm1142, %v1135, %v1139
        %v1144 = vand.u32 2147483647, %v909
        %vm1145 = vcmp.eq.f32.partialorder %v1144, 8.507059e+37
        %v1146 = vand.u32 %v909, 2147483648
        %v1147 = vor.u32 1.1754944e-38, %v1146
        %v1148 = vsel %vm1145, %v1147, %v1143
        %v1149 = vmul.f32 1.0, %v1148
        %v1150 = vmul.f32 %v830, %v924
        %v1151 = vmul.f32 %v831, %v939
        %v1152 = vmul.f32 %v832, %v954
        %v1153 = vmul.f32 %v833, %v969
        %v1154 = vmul.f32 %v834, %v984
        %v1155 = vmul.f32 %v835, %v999
        %v1156 = vmul.f32 %v836, %v1014
        %v1157 = vmul.f32 %v837, %v1029
        %v1158 = vmul.f32 %v838, %v1044
        %v1159 = vmul.f32 %v839, %v1059
        %v1160 = vmul.f32 %v840, %v1074
        %v1161 = vmul.f32 %v841, %v1089
        %v1162 = vmul.f32 %v842, %v1104
        %v1163 = vmul.f32 %v843, %v1119
        %v1164 = vmul.f32 %v844, %v1134
        %v1165 = vmul.f32 %v845, %v1149
        %v1166 = vpack.c.bf16 %v1150, %v1150
        %v1167 = vpack.c.bf16 %v1151, %v1151
        %v1168 = vpack.c.bf16 %v1152, %v1152
        %v1169 = vpack.c.bf16 %v1153, %v1153
        %v1170 = vpack.c.bf16 %v1154, %v1154
        %v1171 = vpack.c.bf16 %v1155, %v1155
        %v1172 = vpack.c.bf16 %v1156, %v1156
        %v1173 = vpack.c.bf16 %v1157, %v1157
        %v1174 = vpack.c.bf16 %v1158, %v1158
        %v1175 = vpack.c.bf16 %v1159, %v1159
        %v1176 = vpack.c.bf16 %v1160, %v1160
        %v1177 = vpack.c.bf16 %v1161, %v1161
        %v1178 = vpack.c.bf16 %v1162, %v1162
        %v1179 = vpack.c.bf16 %v1163, %v1163
        %v1180 = vpack.c.bf16 %v1164, %v1164
        %v1181 = vpack.c.bf16 %v1165, %v1165
        %1182 = vst [vmem:[%s527] sm:$0xf] %v1166
        %1183 = vst [vmem:[%s527 + $0x4] sm:$0xf] %v1167
        %1184 = vst [vmem:[%s527 + $0x8] sm:$0xf] %v1168
        %1185 = vst [vmem:[%s527 + $0xc] sm:$0xf] %v1169
        %1186 = vst [vmem:[%s527 + $0x10] sm:$0xf] %v1170
        %1187 = vst [vmem:[%s527 + $0x14] sm:$0xf] %v1171
        %1188 = vst [vmem:[%s527 + $0x18] sm:$0xf] %v1172
        %1189 = vst [vmem:[%s527 + $0x1c] sm:$0xf] %v1173
        %1190 = vst [vmem:[%s527 + $0x20] sm:$0xf] %v1174
        %1191 = vst [vmem:[%s527 + $0x24] sm:$0xf] %v1175
        %1192 = vst [vmem:[%s527 + $0x28] sm:$0xf] %v1176
        %1193 = vst [vmem:[%s527 + $0x2c] sm:$0xf] %v1177
        %1194 = vst [vmem:[%s527 + $0x30] sm:$0xf] %v1178
        %1195 = vst [vmem:[%s527 + $0x34] sm:$0xf] %v1179
        %1196 = vst [vmem:[%s527 + $0x38] sm:$0xf] %v1180
        %1197 = vst [vmem:[%s527 + $0x3c] sm:$0xf] %v1181
        %v1198 = vld [vmem:[#allocation5] sm:$0xff]
        %v1199 = vld [vmem:[#allocation5 + $0x8] sm:$0xf]
        %v1200 = vld [vmem:[#allocation5 + $0xc] sm:$0xff]
        %v1201 = vld [vmem:[#allocation5 + $0x14] sm:$0xf]
        %v1202 = vld [vmem:[#allocation5 + $0x18] sm:$0xff]
        %v1203 = vld [vmem:[#allocation5 + $0x20] sm:$0xf]
        %v1204 = vld [vmem:[#allocation5 + $0x24] sm:$0xff]
        %v1205 = vld [vmem:[#allocation5 + $0x2c] sm:$0xf]
        %v1206 = vld [vmem:[#allocation5 + $0x30] sm:$0xff]
        %v1207 = vld [vmem:[#allocation5 + $0x38] sm:$0xf]
        %v1208 = vld [vmem:[#allocation5 + $0x3c] sm:$0xff]
        %v1209 = vld [vmem:[#allocation5 + $0x44] sm:$0xf]
        %v1210 = vld [vmem:[#allocation5 + $0x48] sm:$0xff]
        %v1211 = vld [vmem:[#allocation5 + $0x50] sm:$0xf]
        %v1212 = vld [vmem:[#allocation5 + $0x54] sm:$0xff]
        %v1213 = vld [vmem:[#allocation5 + $0x5c] sm:$0xf]
        %v1214 = vld [vmem:[#allocation5 + $0x60] sm:$0xff]
        %v1215 = vld [vmem:[#allocation5 + $0x68] sm:$0xf]
        %v1216 = vld [vmem:[#allocation5 + $0x6c] sm:$0xff]
        %v1217 = vld [vmem:[#allocation5 + $0x74] sm:$0xf]
        %v1218 = vld [vmem:[#allocation5 + $0x78] sm:$0xff]
        %v1219 = vld [vmem:[#allocation5 + $0x80] sm:$0xf]
        %v1220 = vld [vmem:[#allocation5 + $0x84] sm:$0xff]
        %v1221 = vld [vmem:[#allocation5 + $0x8c] sm:$0xf]
        %v1222 = vld [vmem:[#allocation5 + $0x90] sm:$0xff]
        %v1223 = vld [vmem:[#allocation5 + $0x98] sm:$0xf]
        %v1224 = vld [vmem:[#allocation5 + $0x9c] sm:$0xff]
        %v1225 = vld [vmem:[#allocation5 + $0xa4] sm:$0xf]
        %v1226 = vld [vmem:[#allocation5 + $0xa8] sm:$0xff]
        %v1227 = vld [vmem:[#allocation5 + $0xb0] sm:$0xf]
        %v1228 = vld [vmem:[#allocation5 + $0xb4] sm:$0xff]
        %v1229 = vld [vmem:[#allocation5 + $0xbc] sm:$0xf]
        %v1262 = vunpack.c.l.b16 %v1198
        %v1263 = vunpack.c.h.b16 %v1198
        %v1264 = vunpack.c.l.b16 %v1199
        %v1265 = vunpack.c.l.b16 %v1200
        %v1266 = vunpack.c.h.b16 %v1200
        %v1267 = vunpack.c.l.b16 %v1201
        %v1268 = vunpack.c.l.b16 %v1202
        %v1269 = vunpack.c.h.b16 %v1202
        %v1270 = vunpack.c.l.b16 %v1203
        %v1271 = vunpack.c.l.b16 %v1204
        %v1272 = vunpack.c.h.b16 %v1204
        %v1273 = vunpack.c.l.b16 %v1205
        %v1274 = vunpack.c.l.b16 %v1206
        %v1275 = vunpack.c.h.b16 %v1206
        %v1276 = vunpack.c.l.b16 %v1207
        %v1277 = vunpack.c.l.b16 %v1208
        %v1278 = vunpack.c.h.b16 %v1208
        %v1279 = vunpack.c.l.b16 %v1209
        %v1280 = vunpack.c.l.b16 %v1210
        %v1281 = vunpack.c.h.b16 %v1210
        %v1282 = vunpack.c.l.b16 %v1211
        %v1283 = vunpack.c.l.b16 %v1212
        %v1284 = vunpack.c.h.b16 %v1212
        %v1285 = vunpack.c.l.b16 %v1213
        %v1286 = vunpack.c.l.b16 %v1214
        %v1287 = vunpack.c.h.b16 %v1214
        %v1288 = vunpack.c.l.b16 %v1215
        %v1289 = vunpack.c.l.b16 %v1216
        %v1290 = vunpack.c.h.b16 %v1216
        %v1291 = vunpack.c.l.b16 %v1217
        %v1292 = vunpack.c.l.b16 %v1218
        %v1293 = vunpack.c.h.b16 %v1218
        %v1294 = vunpack.c.l.b16 %v1219
        %v1295 = vunpack.c.l.b16 %v1220
        %v1296 = vunpack.c.h.b16 %v1220
        %v1297 = vunpack.c.l.b16 %v1221
        %v1298 = vunpack.c.l.b16 %v1222
        %v1299 = vunpack.c.h.b16 %v1222
        %v1300 = vunpack.c.l.b16 %v1223
        %v1301 = vunpack.c.l.b16 %v1224
        %v1302 = vunpack.c.h.b16 %v1224
        %v1303 = vunpack.c.l.b16 %v1225
        %v1304 = vunpack.c.l.b16 %v1226
        %v1305 = vunpack.c.h.b16 %v1226
        %v1306 = vunpack.c.l.b16 %v1227
        %v1307 = vunpack.c.l.b16 %v1228
        %v1308 = vunpack.c.h.b16 %v1228
        %v1309 = vunpack.c.l.b16 %v1229
        %v1310 = vpack.c.b16 %v1265, %v1262
        %v1311 = vpack.c.b16 %v1266, %v1263
        %v1312 = vpack.c.b16 %v1267, %v1264
        %v1313 = vpack.c.b16 %v1271, %v1268
        %v1314 = vpack.c.b16 %v1272, %v1269
        %v1315 = vpack.c.b16 %v1273, %v1270
        %v1316 = vpack.c.b16 %v1277, %v1274
        %v1317 = vpack.c.b16 %v1278, %v1275
        %v1318 = vpack.c.b16 %v1279, %v1276
        %v1319 = vpack.c.b16 %v1283, %v1280
        %v1320 = vpack.c.b16 %v1284, %v1281
        %v1321 = vpack.c.b16 %v1285, %v1282
        %v1322 = vpack.c.b16 %v1289, %v1286
        %v1323 = vpack.c.b16 %v1290, %v1287
        %v1324 = vpack.c.b16 %v1291, %v1288
        %v1325 = vpack.c.b16 %v1295, %v1292
        %v1326 = vpack.c.b16 %v1296, %v1293
        %v1327 = vpack.c.b16 %v1297, %v1294
        %v1328 = vpack.c.b16 %v1301, %v1298
        %v1329 = vpack.c.b16 %v1302, %v1299
        %v1330 = vpack.c.b16 %v1303, %v1300
        %v1331 = vpack.c.b16 %v1307, %v1304
        %v1332 = vpack.c.b16 %v1308, %v1305
        %v1333 = vpack.c.b16 %v1309, %v1306
        %1358 = vmatpush.bf16.msra.mxu0 %v1331
        %1359 = vmatpush.bf16.msra.mxu0 %v1328
        %1360 = vmatpush.bf16.msra.mxu0 %v1325
        %1361 = vmatpush.bf16.msra.mxu0 %v1322
        %1362 = vmatpush.bf16.msra.mxu0 %v1319
        %1363 = vmatpush.bf16.msra.mxu0 %v1316
        %1364 = vmatpush.bf16.msra.mxu0 %v1313
        %1365 = vmatpush.bf16.msra.mxu0 %v1310
        %1366 = vmatmul.bf16.gmra.mxu0 %v564
        %v1367 = vpop.f32.mrf.mxu0
        %v1368 = vadd.f32 0.0, %v1367
        %v1369 = vpop.f32.mrf.mxu0
        %v1370 = vadd.f32 0.0, %v1369
        %1371 = vmatmul.bf16.gmra.mxu0 %v565
        %v1372 = vpop.f32.mrf.mxu0
        %v1373 = vadd.f32 0.0, %v1372
        %v1374 = vpop.f32.mrf.mxu0
        %v1375 = vadd.f32 0.0, %v1374
        %1376 = vmatmul.bf16.gmra.mxu0 %v566
        %v1377 = vpop.f32.mrf.mxu0
        %v1378 = vadd.f32 0.0, %v1377
        %v1379 = vpop.f32.mrf.mxu0
        %v1380 = vadd.f32 0.0, %v1379
        %1381 = vmatmul.bf16.gmra.mxu0 %v567
        %v1382 = vpop.f32.mrf.mxu0
        %v1383 = vadd.f32 0.0, %v1382
        %v1384 = vpop.f32.mrf.mxu0
        %v1385 = vadd.f32 0.0, %v1384
        %1386 = vmatmul.bf16.gmra.mxu0 %v568
        %v1387 = vpop.f32.mrf.mxu0
        %v1388 = vadd.f32 0.0, %v1387
        %v1389 = vpop.f32.mrf.mxu0
        %v1390 = vadd.f32 0.0, %v1389
        %1391 = vmatmul.bf16.gmra.mxu0 %v569
        %v1392 = vpop.f32.mrf.mxu0
        %v1393 = vadd.f32 0.0, %v1392
        %v1394 = vpop.f32.mrf.mxu0
        %v1395 = vadd.f32 0.0, %v1394
        %1396 = vmatmul.bf16.gmra.mxu0 %v570
        %v1397 = vpop.f32.mrf.mxu0
        %v1398 = vadd.f32 0.0, %v1397
        %v1399 = vpop.f32.mrf.mxu0
        %v1400 = vadd.f32 0.0, %v1399
        %1401 = vmatmul.bf16.gmra.mxu0 %v571
        %v1402 = vpop.f32.mrf.mxu0
        %v1403 = vadd.f32 0.0, %v1402
        %v1404 = vpop.f32.mrf.mxu0
        %v1405 = vadd.f32 0.0, %v1404
        %1406 = vdwg.mxu0
        %1407 = vmatpush.bf16.msra.mxu0 %v1332
        %1408 = vmatpush.bf16.msra.mxu0 %v1329
        %1409 = vmatpush.bf16.msra.mxu0 %v1326
        %1410 = vmatpush.bf16.msra.mxu0 %v1323
        %1411 = vmatpush.bf16.msra.mxu0 %v1320
        %1412 = vmatpush.bf16.msra.mxu0 %v1317
        %1413 = vmatpush.bf16.msra.mxu0 %v1314
        %1414 = vmatpush.bf16.msra.mxu0 %v1311
        %1415 = vmatmul.bf16.gmra.mxu0 %v564
        %v1416 = vpop.f32.mrf.mxu0
        %v1417 = vadd.f32 0.0, %v1416
        %v1418 = vpop.f32.mrf.mxu0
        %v1419 = vadd.f32 0.0, %v1418
        %1420 = vmatmul.bf16.gmra.mxu0 %v565
        %v1421 = vpop.f32.mrf.mxu0
        %v1422 = vadd.f32 0.0, %v1421
        %v1423 = vpop.f32.mrf.mxu0
        %v1424 = vadd.f32 0.0, %v1423
        %1425 = vmatmul.bf16.gmra.mxu0 %v566
        %v1426 = vpop.f32.mrf.mxu0
        %v1427 = vadd.f32 0.0, %v1426
        %v1428 = vpop.f32.mrf.mxu0
        %v1429 = vadd.f32 0.0, %v1428
        %1430 = vmatmul.bf16.gmra.mxu0 %v567
        %v1431 = vpop.f32.mrf.mxu0
        %v1432 = vadd.f32 0.0, %v1431
        %v1433 = vpop.f32.mrf.mxu0
        %v1434 = vadd.f32 0.0, %v1433
        %1435 = vmatmul.bf16.gmra.mxu0 %v568
        %v1436 = vpop.f32.mrf.mxu0
        %v1437 = vadd.f32 0.0, %v1436
        %v1438 = vpop.f32.mrf.mxu0
        %v1439 = vadd.f32 0.0, %v1438
        %1440 = vmatmul.bf16.gmra.mxu0 %v569
        %v1441 = vpop.f32.mrf.mxu0
        %v1442 = vadd.f32 0.0, %v1441
        %v1443 = vpop.f32.mrf.mxu0
        %v1444 = vadd.f32 0.0, %v1443
        %1445 = vmatmul.bf16.gmra.mxu0 %v570
        %v1446 = vpop.f32.mrf.mxu0
        %v1447 = vadd.f32 0.0, %v1446
        %v1448 = vpop.f32.mrf.mxu0
        %v1449 = vadd.f32 0.0, %v1448
        %1450 = vmatmul.bf16.gmra.mxu0 %v571
        %v1451 = vpop.f32.mrf.mxu0
        %v1452 = vadd.f32 0.0, %v1451
        %v1453 = vpop.f32.mrf.mxu0
        %v1454 = vadd.f32 0.0, %v1453
        %1455 = vdwg.mxu0
        %1456 = vmatpush.bf16.msra.mxu0 %v1333
        %1457 = vmatpush.bf16.msra.mxu0 %v1330
        %1458 = vmatpush.bf16.msra.mxu0 %v1327
        %1459 = vmatpush.bf16.msra.mxu0 %v1324
        %1460 = vmatpush.bf16.msra.mxu0 %v1321
        %1461 = vmatpush.bf16.msra.mxu0 %v1318
        %1462 = vmatpush.bf16.msra.mxu0 %v1315
        %1463 = vmatpush.bf16.msra.mxu0 %v1312
        %1464 = vmatmul.bf16.gmra.mxu0 %v564
        %v1465 = vpop.f32.mrf.mxu0
        %v1466 = vadd.f32 0.0, %v1465
        %v1467 = vpop.f32.mrf.mxu0
        %v1468 = vadd.f32 0.0, %v1467
        %1469 = vmatmul.bf16.gmra.mxu0 %v565
        %v1470 = vpop.f32.mrf.mxu0
        %v1471 = vadd.f32 0.0, %v1470
        %v1472 = vpop.f32.mrf.mxu0
        %v1473 = vadd.f32 0.0, %v1472
        %1474 = vmatmul.bf16.gmra.mxu0 %v566
        %v1475 = vpop.f32.mrf.mxu0
        %v1476 = vadd.f32 0.0, %v1475
        %v1477 = vpop.f32.mrf.mxu0
        %v1478 = vadd.f32 0.0, %v1477
        %1479 = vmatmul.bf16.gmra.mxu0 %v567
        %v1480 = vpop.f32.mrf.mxu0
        %v1481 = vadd.f32 0.0, %v1480
        %v1482 = vpop.f32.mrf.mxu0
        %v1483 = vadd.f32 0.0, %v1482
        %1484 = vmatmul.bf16.gmra.mxu0 %v568
        %v1485 = vpop.f32.mrf.mxu0
        %v1486 = vadd.f32 0.0, %v1485
        %v1487 = vpop.f32.mrf.mxu0
        %v1488 = vadd.f32 0.0, %v1487
        %1489 = vmatmul.bf16.gmra.mxu0 %v569
        %v1490 = vpop.f32.mrf.mxu0
        %v1491 = vadd.f32 0.0, %v1490
        %v1492 = vpop.f32.mrf.mxu0
        %v1493 = vadd.f32 0.0, %v1492
        %1494 = vmatmul.bf16.gmra.mxu0 %v570
        %v1495 = vpop.f32.mrf.mxu0
        %v1496 = vadd.f32 0.0, %v1495
        %v1497 = vpop.f32.mrf.mxu0
        %v1498 = vadd.f32 0.0, %v1497
        %1499 = vmatmul.bf16.gmra.mxu0 %v571
        %v1500 = vpop.f32.mrf.mxu0
        %v1501 = vadd.f32 0.0, %v1500
        %v1502 = vpop.f32.mrf.mxu0
        %v1503 = vadd.f32 0.0, %v1502
        %1504 = vdwg.mxu0
        %v1505 = vld [vmem:[%s472] sm:$0xff]
        %v1506 = vld [vmem:[%s472 + $0x8] sm:$0xff]
        %v1507 = vld [vmem:[%s472 + $0x10] sm:$0xff]
        %v1508 = vld [vmem:[%s472 + $0x18] sm:$0xff]
        %v1509 = vld [vmem:[%s472 + $0x20] sm:$0xff]
        %v1510 = vld [vmem:[%s472 + $0x28] sm:$0xff]
        %v1511 = vld [vmem:[%s472 + $0x30] sm:$0xff]
        %v1512 = vld [vmem:[%s472 + $0x38] sm:$0xff]
        %v1513 = vld [vmem:[%s472 + $0x40] sm:$0xff]
        %v1514 = vld [vmem:[%s472 + $0x48] sm:$0xff]
        %v1515 = vld [vmem:[%s472 + $0x50] sm:$0xff]
        %v1516 = vld [vmem:[%s472 + $0x58] sm:$0xff]
        %v1517 = vld [vmem:[%s472 + $0x60] sm:$0xff]
        %v1518 = vld [vmem:[%s472 + $0x68] sm:$0xff]
        %v1519 = vld [vmem:[%s472 + $0x70] sm:$0xff]
        %v1520 = vld [vmem:[%s472 + $0x78] sm:$0xff]
        %v1521 = vmul.f32 %v1368, %v1505
        %v1522 = vmul.f32 %v1370, %v1506
        %v1523 = vmul.f32 %v1373, %v1507
        %v1524 = vmul.f32 %v1375, %v1508
        %v1525 = vmul.f32 %v1378, %v1509
        %v1526 = vmul.f32 %v1380, %v1510
        %v1527 = vmul.f32 %v1383, %v1511
        %v1528 = vmul.f32 %v1385, %v1512
        %v1529 = vmul.f32 %v1388, %v1513
        %v1530 = vmul.f32 %v1390, %v1514
        %v1531 = vmul.f32 %v1393, %v1515
        %v1532 = vmul.f32 %v1395, %v1516
        %v1533 = vmul.f32 %v1398, %v1517
        %v1534 = vmul.f32 %v1400, %v1518
        %v1535 = vmul.f32 %v1403, %v1519
        %v1536 = vmul.f32 %v1405, %v1520
        %v1537 = vld [vmem:[%s482] sm:$0xff]
        %v1538 = vld [vmem:[%s482 + $0x8] sm:$0xff]
        %v1539 = vld [vmem:[%s482 + $0x10] sm:$0xff]
        %v1540 = vld [vmem:[%s482 + $0x18] sm:$0xff]
        %v1541 = vld [vmem:[%s482 + $0x20] sm:$0xff]
        %v1542 = vld [vmem:[%s482 + $0x28] sm:$0xff]
        %v1543 = vld [vmem:[%s482 + $0x30] sm:$0xff]
        %v1544 = vld [vmem:[%s482 + $0x38] sm:$0xff]
        %v1545 = vld [vmem:[%s482 + $0x40] sm:$0xff]
        %v1546 = vld [vmem:[%s482 + $0x48] sm:$0xff]
        %v1547 = vld [vmem:[%s482 + $0x50] sm:$0xff]
        %v1548 = vld [vmem:[%s482 + $0x58] sm:$0xff]
        %v1549 = vld [vmem:[%s482 + $0x60] sm:$0xff]
        %v1550 = vld [vmem:[%s482 + $0x68] sm:$0xff]
        %v1551 = vld [vmem:[%s482 + $0x70] sm:$0xff]
        %v1552 = vld [vmem:[%s482 + $0x78] sm:$0xff]
        %v1553 = vmul.f32 %v1417, %v1537
        %v1554 = vmul.f32 %v1419, %v1538
        %v1555 = vmul.f32 %v1422, %v1539
        %v1556 = vmul.f32 %v1424, %v1540
        %v1557 = vmul.f32 %v1427, %v1541
        %v1558 = vmul.f32 %v1429, %v1542
        %v1559 = vmul.f32 %v1432, %v1543
        %v1560 = vmul.f32 %v1434, %v1544
        %v1561 = vmul.f32 %v1437, %v1545
        %v1562 = vmul.f32 %v1439, %v1546
        %v1563 = vmul.f32 %v1442, %v1547
        %v1564 = vmul.f32 %v1444, %v1548
        %v1565 = vmul.f32 %v1447, %v1549
        %v1566 = vmul.f32 %v1449, %v1550
        %v1567 = vmul.f32 %v1452, %v1551
        %v1568 = vmul.f32 %v1454, %v1552
        %v1569 = vadd.f32 %v1521, %v1553
        %v1570 = vadd.f32 %v1522, %v1554
        %v1571 = vadd.f32 %v1523, %v1555
        %v1572 = vadd.f32 %v1524, %v1556
        %v1573 = vadd.f32 %v1525, %v1557
        %v1574 = vadd.f32 %v1526, %v1558
        %v1575 = vadd.f32 %v1527, %v1559
        %v1576 = vadd.f32 %v1528, %v1560
        %v1577 = vadd.f32 %v1529, %v1561
        %v1578 = vadd.f32 %v1530, %v1562
        %v1579 = vadd.f32 %v1531, %v1563
        %v1580 = vadd.f32 %v1532, %v1564
        %v1581 = vadd.f32 %v1533, %v1565
        %v1582 = vadd.f32 %v1534, %v1566
        %v1583 = vadd.f32 %v1535, %v1567
        %v1584 = vadd.f32 %v1536, %v1568
        %v1585 = vld [vmem:[%s7] sm:$0xff]
        %v1586 = vld [vmem:[%s7 + $0x8] sm:$0xff]
        %v1587 = vld [vmem:[%s7 + $0x10] sm:$0xff]
        %v1588 = vld [vmem:[%s7 + $0x18] sm:$0xff]
        %v1589 = vld [vmem:[%s7 + $0x20] sm:$0xff]
        %v1590 = vld [vmem:[%s7 + $0x28] sm:$0xff]
        %v1591 = vld [vmem:[%s7 + $0x30] sm:$0xff]
        %v1592 = vld [vmem:[%s7 + $0x38] sm:$0xff]
        %v1593 = vld [vmem:[%s7 + $0x40] sm:$0xff]
        %v1594 = vld [vmem:[%s7 + $0x48] sm:$0xff]
        %v1595 = vld [vmem:[%s7 + $0x50] sm:$0xff]
        %v1596 = vld [vmem:[%s7 + $0x58] sm:$0xff]
        %v1597 = vld [vmem:[%s7 + $0x60] sm:$0xff]
        %v1598 = vld [vmem:[%s7 + $0x68] sm:$0xff]
        %v1599 = vld [vmem:[%s7 + $0x70] sm:$0xff]
        %v1600 = vld [vmem:[%s7 + $0x78] sm:$0xff]
        %1601 = vmatpush.msra.mxu0 %v1600
        %1602 = vmatpush.msra.mxu0 %v1599
        %1603 = vmatpush.msra.mxu0 %v1598
        %1604 = vmatpush.msra.mxu0 %v1597
        %1605 = vmatpush.msra.mxu0 %v1596
        %1606 = vmatpush.msra.mxu0 %v1595
        %1607 = vmatpush.msra.mxu0 %v1594
        %1608 = vmatpush.msra.mxu0 %v1593
        %1609 = vmatpush.msra.mxu0 %v1592
        %1610 = vmatpush.msra.mxu0 %v1591
        %1611 = vmatpush.msra.mxu0 %v1590
        %1612 = vmatpush.msra.mxu0 %v1589
        %1613 = vmatpush.msra.mxu0 %v1588
        %1614 = vmatpush.msra.mxu0 %v1587
        %1615 = vmatpush.msra.mxu0 %v1586
        %1616 = vmatpush.msra.mxu0 %v1585
        %1617 = vmatmul.f32.gmra.mxu0 %v1569
        %v1618 = vpop.f32.mrf.mxu0
        %v1619 = vadd.f32 0.0, %v1618
        %1620 = vmatmul.f32.gmra.mxu0 %v1570
        %v1621 = vpop.f32.mrf.mxu0
        %v1622 = vadd.f32 0.0, %v1621
        %1623 = vmatmul.f32.gmra.mxu0 %v1571
        %v1624 = vpop.f32.mrf.mxu0
        %v1625 = vadd.f32 0.0, %v1624
        %1626 = vmatmul.f32.gmra.mxu0 %v1572
        %v1627 = vpop.f32.mrf.mxu0
        %v1628 = vadd.f32 0.0, %v1627
        %1629 = vmatmul.f32.gmra.mxu0 %v1573
        %v1630 = vpop.f32.mrf.mxu0
        %v1631 = vadd.f32 0.0, %v1630
        %1632 = vmatmul.f32.gmra.mxu0 %v1574
        %v1633 = vpop.f32.mrf.mxu0
        %v1634 = vadd.f32 0.0, %v1633
        %1635 = vmatmul.f32.gmra.mxu0 %v1575
        %v1636 = vpop.f32.mrf.mxu0
        %v1637 = vadd.f32 0.0, %v1636
        %1638 = vmatmul.f32.gmra.mxu0 %v1576
        %v1639 = vpop.f32.mrf.mxu0
        %v1640 = vadd.f32 0.0, %v1639
        %1641 = vmatmul.f32.gmra.mxu0 %v1577
        %v1642 = vpop.f32.mrf.mxu0
        %v1643 = vadd.f32 0.0, %v1642
        %1644 = vmatmul.f32.gmra.mxu0 %v1578
        %v1645 = vpop.f32.mrf.mxu0
        %v1646 = vadd.f32 0.0, %v1645
        %1647 = vmatmul.f32.gmra.mxu0 %v1579
        %v1648 = vpop.f32.mrf.mxu0
        %v1649 = vadd.f32 0.0, %v1648
        %1650 = vmatmul.f32.gmra.mxu0 %v1580
        %v1651 = vpop.f32.mrf.mxu0
        %v1652 = vadd.f32 0.0, %v1651
        %1653 = vmatmul.f32.gmra.mxu0 %v1581
        %v1654 = vpop.f32.mrf.mxu0
        %v1655 = vadd.f32 0.0, %v1654
        %1656 = vmatmul.f32.gmra.mxu0 %v1582
        %v1657 = vpop.f32.mrf.mxu0
        %v1658 = vadd.f32 0.0, %v1657
        %1659 = vmatmul.f32.gmra.mxu0 %v1583
        %v1660 = vpop.f32.mrf.mxu0
        %v1661 = vadd.f32 0.0, %v1660
        %1662 = vmatmul.f32.gmra.mxu0 %v1584
        %v1663 = vpop.f32.mrf.mxu0
        %v1664 = vadd.f32 0.0, %v1663
        %1665 = vdwg.mxu0
        %v1666 = vld [vmem:[%s8] sm:$0xf]
        %vm1667 = vcmask 31744
        %v1669 = vsel %vm1667, %v1619, 0
        %v1672 = vsel %vm1667, %v1622, 0
        %v1675 = vsel %vm1667, %v1625, 0
        %v1678 = vsel %vm1667, %v1628, 0
        %v1681 = vsel %vm1667, %v1631, 0
        %v1684 = vsel %vm1667, %v1634, 0
        %v1687 = vsel %vm1667, %v1637, 0
        %v1690 = vsel %vm1667, %v1640, 0
        %v1693 = vsel %vm1667, %v1643, 0
        %v1696 = vsel %vm1667, %v1646, 0
        %v1699 = vsel %vm1667, %v1649, 0
        %v1702 = vsel %vm1667, %v1652, 0
        %v1705 = vsel %vm1667, %v1655, 0
        %v1708 = vsel %vm1667, %v1658, 0
        %v1711 = vsel %vm1667, %v1661, 0
        %v1714 = vsel %vm1667, %v1664, 0
        %vm1716 = vcmask 1043456
        %v1718 = vsel %vm1716, %v1666, 0
        %1720 = vmatpush.msra.mxu0 0.0
        %1721 = vmatpush.msra.mxu0 0.0
        %1722 = vmatpush.msra.mxu0 0.0
        %1723 = vmatpush.msra.mxu0 0.0
        %1724 = vmatpush.msra.mxu0 0.0
        %1725 = vmatpush.msra.mxu0 0.0
        %1726 = vmatpush.msra.mxu0 0.0
        %1727 = vmatpush.msra.mxu0 0.0
        %1728 = vmatpush.msra.mxu0 0.0
        %1729 = vmatpush.msra.mxu0 0.0
        %1730 = vmatpush.msra.mxu0 0.0
        %1731 = vmatpush.msra.mxu0 0.0
        %1732 = vmatpush.msra.mxu0 0.0
        %1733 = vmatpush.msra.mxu0 0.0
        %1734 = vmatpush.msra.mxu0 0.0
        %1735 = vmatpush.msra.mxu0 %v1718
        %1736 = vmatmul.f32.gmra.mxu0 %v1669
        %v1737 = vpop.f32.mrf.mxu0
        %v1738 = vadd.f32 0.0, %v1737
        %1739 = vmatmul.f32.gmra.mxu0 %v1672
        %v1740 = vpop.f32.mrf.mxu0
        %v1741 = vadd.f32 0.0, %v1740
        %1742 = vmatmul.f32.gmra.mxu0 %v1675
        %v1743 = vpop.f32.mrf.mxu0
        %v1744 = vadd.f32 0.0, %v1743
        %1745 = vmatmul.f32.gmra.mxu0 %v1678
        %v1746 = vpop.f32.mrf.mxu0
        %v1747 = vadd.f32 0.0, %v1746
        %1748 = vmatmul.f32.gmra.mxu0 %v1681
        %v1749 = vpop.f32.mrf.mxu0
        %v1750 = vadd.f32 0.0, %v1749
        %1751 = vmatmul.f32.gmra.mxu0 %v1684
        %v1752 = vpop.f32.mrf.mxu0
        %v1753 = vadd.f32 0.0, %v1752
        %1754 = vmatmul.f32.gmra.mxu0 %v1687
        %v1755 = vpop.f32.mrf.mxu0
        %v1756 = vadd.f32 0.0, %v1755
        %1757 = vmatmul.f32.gmra.mxu0 %v1690
        %v1758 = vpop.f32.mrf.mxu0
        %v1759 = vadd.f32 0.0, %v1758
        %1760 = vmatmul.f32.gmra.mxu0 %v1693
        %v1761 = vpop.f32.mrf.mxu0
        %v1762 = vadd.f32 0.0, %v1761
        %1763 = vmatmul.f32.gmra.mxu0 %v1696
        %v1764 = vpop.f32.mrf.mxu0
        %v1765 = vadd.f32 0.0, %v1764
        %1766 = vmatmul.f32.gmra.mxu0 %v1699
        %v1767 = vpop.f32.mrf.mxu0
        %v1768 = vadd.f32 0.0, %v1767
        %1769 = vmatmul.f32.gmra.mxu0 %v1702
        %v1770 = vpop.f32.mrf.mxu0
        %v1771 = vadd.f32 0.0, %v1770
        %1772 = vmatmul.f32.gmra.mxu0 %v1705
        %v1773 = vpop.f32.mrf.mxu0
        %v1774 = vadd.f32 0.0, %v1773
        %1775 = vmatmul.f32.gmra.mxu0 %v1708
        %v1776 = vpop.f32.mrf.mxu0
        %v1777 = vadd.f32 0.0, %v1776
        %1778 = vmatmul.f32.gmra.mxu0 %v1711
        %v1779 = vpop.f32.mrf.mxu0
        %v1780 = vadd.f32 0.0, %v1779
        %1781 = vmatmul.f32.gmra.mxu0 %v1714
        %v1782 = vpop.f32.mrf.mxu0
        %v1783 = vadd.f32 0.0, %v1782
        %1784 = vdwg.mxu0
        %v1785 = vsub.f32 %v1569, %v1738
        %v1786 = vsub.f32 %v1570, %v1741
        %v1787 = vsub.f32 %v1571, %v1744
        %v1788 = vsub.f32 %v1572, %v1747
        %v1789 = vsub.f32 %v1573, %v1750
        %v1790 = vsub.f32 %v1574, %v1753
        %v1791 = vsub.f32 %v1575, %v1756
        %v1792 = vsub.f32 %v1576, %v1759
        %v1793 = vsub.f32 %v1577, %v1762
        %v1794 = vsub.f32 %v1578, %v1765
        %v1795 = vsub.f32 %v1579, %v1768
        %v1796 = vsub.f32 %v1580, %v1771
        %v1797 = vsub.f32 %v1581, %v1774
        %v1798 = vsub.f32 %v1582, %v1777
        %v1799 = vsub.f32 %v1583, %v1780
        %v1800 = vsub.f32 %v1584, %v1783
        %v1801 = vmul.f32 %v1785, %v1785
        %v1802 = vmul.f32 %v1786, %v1786
        %v1803 = vmul.f32 %v1787, %v1787
        %v1804 = vmul.f32 %v1788, %v1788
        %v1805 = vmul.f32 %v1789, %v1789
        %v1806 = vmul.f32 %v1790, %v1790
        %v1807 = vmul.f32 %v1791, %v1791
        %v1808 = vmul.f32 %v1792, %v1792
        %v1809 = vmul.f32 %v1793, %v1793
        %v1810 = vmul.f32 %v1794, %v1794
        %v1811 = vmul.f32 %v1795, %v1795
        %v1812 = vmul.f32 %v1796, %v1796
        %v1813 = vmul.f32 %v1797, %v1797
        %v1814 = vmul.f32 %v1798, %v1798
        %v1815 = vmul.f32 %v1799, %v1799
        %v1816 = vmul.f32 %v1800, %v1800
        %1817 = vmatpush.msra.mxu0 %v1600
        %1818 = vmatpush.msra.mxu0 %v1599
        %1819 = vmatpush.msra.mxu0 %v1598
        %1820 = vmatpush.msra.mxu0 %v1597
        %1821 = vmatpush.msra.mxu0 %v1596
        %1822 = vmatpush.msra.mxu0 %v1595
        %1823 = vmatpush.msra.mxu0 %v1594
        %1824 = vmatpush.msra.mxu0 %v1593
        %1825 = vmatpush.msra.mxu0 %v1592
        %1826 = vmatpush.msra.mxu0 %v1591
        %1827 = vmatpush.msra.mxu0 %v1590
        %1828 = vmatpush.msra.mxu0 %v1589
        %1829 = vmatpush.msra.mxu0 %v1588
        %1830 = vmatpush.msra.mxu0 %v1587
        %1831 = vmatpush.msra.mxu0 %v1586
        %1832 = vmatpush.msra.mxu0 %v1585
        %1833 = vmatmul.f32.gmra.mxu0 %v1801
        %v1834 = vpop.f32.mrf.mxu0
        %v1835 = vadd.f32 0.0, %v1834
        %1836 = vmatmul.f32.gmra.mxu0 %v1802
        %v1837 = vpop.f32.mrf.mxu0
        %v1838 = vadd.f32 0.0, %v1837
        %1839 = vmatmul.f32.gmra.mxu0 %v1803
        %v1840 = vpop.f32.mrf.mxu0
        %v1841 = vadd.f32 0.0, %v1840
        %1842 = vmatmul.f32.gmra.mxu0 %v1804
        %v1843 = vpop.f32.mrf.mxu0
        %v1844 = vadd.f32 0.0, %v1843
        %1845 = vmatmul.f32.gmra.mxu0 %v1805
        %v1846 = vpop.f32.mrf.mxu0
        %v1847 = vadd.f32 0.0, %v1846
        %1848 = vmatmul.f32.gmra.mxu0 %v1806
        %v1849 = vpop.f32.mrf.mxu0
        %v1850 = vadd.f32 0.0, %v1849
        %1851 = vmatmul.f32.gmra.mxu0 %v1807
        %v1852 = vpop.f32.mrf.mxu0
        %v1853 = vadd.f32 0.0, %v1852
        %1854 = vmatmul.f32.gmra.mxu0 %v1808
        %v1855 = vpop.f32.mrf.mxu0
        %v1856 = vadd.f32 0.0, %v1855
        %1857 = vmatmul.f32.gmra.mxu0 %v1809
        %v1858 = vpop.f32.mrf.mxu0
        %v1859 = vadd.f32 0.0, %v1858
        %1860 = vmatmul.f32.gmra.mxu0 %v1810
        %v1861 = vpop.f32.mrf.mxu0
        %v1862 = vadd.f32 0.0, %v1861
        %1863 = vmatmul.f32.gmra.mxu0 %v1811
        %v1864 = vpop.f32.mrf.mxu0
        %v1865 = vadd.f32 0.0, %v1864
        %1866 = vmatmul.f32.gmra.mxu0 %v1812
        %v1867 = vpop.f32.mrf.mxu0
        %v1868 = vadd.f32 0.0, %v1867
        %1869 = vmatmul.f32.gmra.mxu0 %v1813
        %v1870 = vpop.f32.mrf.mxu0
        %v1871 = vadd.f32 0.0, %v1870
        %1872 = vmatmul.f32.gmra.mxu0 %v1814
        %v1873 = vpop.f32.mrf.mxu0
        %v1874 = vadd.f32 0.0, %v1873
        %1875 = vmatmul.f32.gmra.mxu0 %v1815
        %v1876 = vpop.f32.mrf.mxu0
        %v1877 = vadd.f32 0.0, %v1876
        %1878 = vmatmul.f32.gmra.mxu0 %v1816
        %v1879 = vpop.f32.mrf.mxu0
        %v1880 = vadd.f32 0.0, %v1879
        %1881 = vdwg.mxu0
        %v1883 = vsel %vm1667, %v1835, 0
        %v1886 = vsel %vm1667, %v1838, 0
        %v1889 = vsel %vm1667, %v1841, 0
        %v1892 = vsel %vm1667, %v1844, 0
        %v1895 = vsel %vm1667, %v1847, 0
        %v1898 = vsel %vm1667, %v1850, 0
        %v1901 = vsel %vm1667, %v1853, 0
        %v1904 = vsel %vm1667, %v1856, 0
        %v1907 = vsel %vm1667, %v1859, 0
        %v1910 = vsel %vm1667, %v1862, 0
        %v1913 = vsel %vm1667, %v1865, 0
        %v1916 = vsel %vm1667, %v1868, 0
        %v1919 = vsel %vm1667, %v1871, 0
        %v1922 = vsel %vm1667, %v1874, 0
        %v1925 = vsel %vm1667, %v1877, 0
        %v1928 = vsel %vm1667, %v1880, 0
        %1930 = vmatpush.msra.mxu0 0.0
        %1931 = vmatpush.msra.mxu0 0.0
        %1932 = vmatpush.msra.mxu0 0.0
        %1933 = vmatpush.msra.mxu0 0.0
        %1934 = vmatpush.msra.mxu0 0.0
        %1935 = vmatpush.msra.mxu0 0.0
        %1936 = vmatpush.msra.mxu0 0.0
        %1937 = vmatpush.msra.mxu0 0.0
        %1938 = vmatpush.msra.mxu0 0.0
        %1939 = vmatpush.msra.mxu0 0.0
        %1940 = vmatpush.msra.mxu0 0.0
        %1941 = vmatpush.msra.mxu0 0.0
        %1942 = vmatpush.msra.mxu0 0.0
        %1943 = vmatpush.msra.mxu0 0.0
        %1944 = vmatpush.msra.mxu0 0.0
        %1945 = vmatpush.msra.mxu0 %v1718
        %1946 = vmatmul.f32.gmra.mxu0 %v1883
        %v1947 = vpop.f32.mrf.mxu0
        %v1948 = vadd.f32 1e-05, %v1947
        %1949 = vmatmul.f32.gmra.mxu0 %v1886
        %v1950 = vpop.f32.mrf.mxu0
        %v1951 = vadd.f32 1e-05, %v1950
        %1952 = vmatmul.f32.gmra.mxu0 %v1889
        %v1953 = vpop.f32.mrf.mxu0
        %v1954 = vadd.f32 1e-05, %v1953
        %1955 = vmatmul.f32.gmra.mxu0 %v1892
        %v1956 = vpop.f32.mrf.mxu0
        %v1957 = vadd.f32 1e-05, %v1956
        %1958 = vmatmul.f32.gmra.mxu0 %v1895
        %v1959 = vpop.f32.mrf.mxu0
        %v1960 = vadd.f32 1e-05, %v1959
        %1961 = vmatmul.f32.gmra.mxu0 %v1898
        %v1962 = vpop.f32.mrf.mxu0
        %v1963 = vadd.f32 1e-05, %v1962
        %1964 = vmatmul.f32.gmra.mxu0 %v1901
        %v1965 = vpop.f32.mrf.mxu0
        %v1966 = vadd.f32 1e-05, %v1965
        %1967 = vmatmul.f32.gmra.mxu0 %v1904
        %v1968 = vpop.f32.mrf.mxu0
        %v1969 = vadd.f32 1e-05, %v1968
        %1970 = vmatmul.f32.gmra.mxu0 %v1907
        %v1971 = vpop.f32.mrf.mxu0
        %v1972 = vadd.f32 1e-05, %v1971
        %1973 = vmatmul.f32.gmra.mxu0 %v1910
        %v1974 = vpop.f32.mrf.mxu0
        %v1975 = vadd.f32 1e-05, %v1974
        %1976 = vmatmul.f32.gmra.mxu0 %v1913
        %v1977 = vpop.f32.mrf.mxu0
        %v1978 = vadd.f32 1e-05, %v1977
        %1979 = vmatmul.f32.gmra.mxu0 %v1916
        %v1980 = vpop.f32.mrf.mxu0
        %v1981 = vadd.f32 1e-05, %v1980
        %1982 = vmatmul.f32.gmra.mxu0 %v1919
        %v1983 = vpop.f32.mrf.mxu0
        %v1984 = vadd.f32 1e-05, %v1983
        %1985 = vmatmul.f32.gmra.mxu0 %v1922
        %v1986 = vpop.f32.mrf.mxu0
        %v1987 = vadd.f32 1e-05, %v1986
        %1988 = vmatmul.f32.gmra.mxu0 %v1925
        %v1989 = vpop.f32.mrf.mxu0
        %v1990 = vadd.f32 1e-05, %v1989
        %1991 = vmatmul.f32.gmra.mxu0 %v1928
        %v1992 = vpop.f32.mrf.mxu0
        %v1993 = vadd.f32 1e-05, %v1992
        %1994 = vdwg.mxu0
        %v1995 = vrsqrt.pop %v1948
        %v1996 = vmul.f32 %v1995, %v1948
        %v1997 = vmul.f32 %v1996, %v1995
        %v1998 = vmul.f32 0.5, %v1997
        %v1999 = vsub.f32 1.5, %v1998
        %v2000 = vmul.f32 %v1995, %v1999
        %vm2001 = vweird.f32 %v1948
        %vm2002 = vweird.f32 %v1995
        %vm2003 = vmor %vm2001, %vm2002
        %v2004 = vsel %vm2003, %v1995, %v2000
        %v2005 = vrsqrt.pop %v1951
        %v2006 = vmul.f32 %v2005, %v1951
        %v2007 = vmul.f32 %v2006, %v2005
        %v2008 = vmul.f32 0.5, %v2007
        %v2009 = vsub.f32 1.5, %v2008
        %v2010 = vmul.f32 %v2005, %v2009
        %vm2011 = vweird.f32 %v1951
        %vm2012 = vweird.f32 %v2005
        %vm2013 = vmor %vm2011, %vm2012
        %v2014 = vsel %vm2013, %v2005, %v2010
        %v2015 = vrsqrt.pop %v1954
        %v2016 = vmul.f32 %v2015, %v1954
        %v2017 = vmul.f32 %v2016, %v2015
        %v2018 = vmul.f32 0.5, %v2017
        %v2019 = vsub.f32 1.5, %v2018
        %v2020 = vmul.f32 %v2015, %v2019
        %vm2021 = vweird.f32 %v1954
        %vm2022 = vweird.f32 %v2015
        %vm2023 = vmor %vm2021, %vm2022
        %v2024 = vsel %vm2023, %v2015, %v2020
        %v2025 = vrsqrt.pop %v1957
        %v2026 = vmul.f32 %v2025, %v1957
        %v2027 = vmul.f32 %v2026, %v2025
        %v2028 = vmul.f32 0.5, %v2027
        %v2029 = vsub.f32 1.5, %v2028
        %v2030 = vmul.f32 %v2025, %v2029
        %vm2031 = vweird.f32 %v1957
        %vm2032 = vweird.f32 %v2025
        %vm2033 = vmor %vm2031, %vm2032
        %v2034 = vsel %vm2033, %v2025, %v2030
        %v2035 = vrsqrt.pop %v1960
        %v2036 = vmul.f32 %v2035, %v1960
        %v2037 = vmul.f32 %v2036, %v2035
        %v2038 = vmul.f32 0.5, %v2037
        %v2039 = vsub.f32 1.5, %v2038
        %v2040 = vmul.f32 %v2035, %v2039
        %vm2041 = vweird.f32 %v1960
        %vm2042 = vweird.f32 %v2035
        %vm2043 = vmor %vm2041, %vm2042
        %v2044 = vsel %vm2043, %v2035, %v2040
        %v2045 = vrsqrt.pop %v1963
        %v2046 = vmul.f32 %v2045, %v1963
        %v2047 = vmul.f32 %v2046, %v2045
        %v2048 = vmul.f32 0.5, %v2047
        %v2049 = vsub.f32 1.5, %v2048
        %v2050 = vmul.f32 %v2045, %v2049
        %vm2051 = vweird.f32 %v1963
        %vm2052 = vweird.f32 %v2045
        %vm2053 = vmor %vm2051, %vm2052
        %v2054 = vsel %vm2053, %v2045, %v2050
        %v2055 = vrsqrt.pop %v1966
        %v2056 = vmul.f32 %v2055, %v1966
        %v2057 = vmul.f32 %v2056, %v2055
        %v2058 = vmul.f32 0.5, %v2057
        %v2059 = vsub.f32 1.5, %v2058
        %v2060 = vmul.f32 %v2055, %v2059
        %vm2061 = vweird.f32 %v1966
        %vm2062 = vweird.f32 %v2055
        %vm2063 = vmor %vm2061, %vm2062
        %v2064 = vsel %vm2063, %v2055, %v2060
        %v2065 = vrsqrt.pop %v1969
        %v2066 = vmul.f32 %v2065, %v1969
        %v2067 = vmul.f32 %v2066, %v2065
        %v2068 = vmul.f32 0.5, %v2067
        %v2069 = vsub.f32 1.5, %v2068
        %v2070 = vmul.f32 %v2065, %v2069
        %vm2071 = vweird.f32 %v1969
        %vm2072 = vweird.f32 %v2065
        %vm2073 = vmor %vm2071, %vm2072
        %v2074 = vsel %vm2073, %v2065, %v2070
        %v2075 = vrsqrt.pop %v1972
        %v2076 = vmul.f32 %v2075, %v1972
        %v2077 = vmul.f32 %v2076, %v2075
        %v2078 = vmul.f32 0.5, %v2077
        %v2079 = vsub.f32 1.5, %v2078
        %v2080 = vmul.f32 %v2075, %v2079
        %vm2081 = vweird.f32 %v1972
        %vm2082 = vweird.f32 %v2075
        %vm2083 = vmor %vm2081, %vm2082
        %v2084 = vsel %vm2083, %v2075, %v2080
        %v2085 = vrsqrt.pop %v1975
        %v2086 = vmul.f32 %v2085, %v1975
        %v2087 = vmul.f32 %v2086, %v2085
        %v2088 = vmul.f32 0.5, %v2087
        %v2089 = vsub.f32 1.5, %v2088
        %v2090 = vmul.f32 %v2085, %v2089
        %vm2091 = vweird.f32 %v1975
        %vm2092 = vweird.f32 %v2085
        %vm2093 = vmor %vm2091, %vm2092
        %v2094 = vsel %vm2093, %v2085, %v2090
        %v2095 = vrsqrt.pop %v1978
        %v2096 = vmul.f32 %v2095, %v1978
        %v2097 = vmul.f32 %v2096, %v2095
        %v2098 = vmul.f32 0.5, %v2097
        %v2099 = vsub.f32 1.5, %v2098
        %v2100 = vmul.f32 %v2095, %v2099
        %vm2101 = vweird.f32 %v1978
        %vm2102 = vweird.f32 %v2095
        %vm2103 = vmor %vm2101, %vm2102
        %v2104 = vsel %vm2103, %v2095, %v2100
        %v2105 = vrsqrt.pop %v1981
        %v2106 = vmul.f32 %v2105, %v1981
        %v2107 = vmul.f32 %v2106, %v2105
        %v2108 = vmul.f32 0.5, %v2107
        %v2109 = vsub.f32 1.5, %v2108
        %v2110 = vmul.f32 %v2105, %v2109
        %vm2111 = vweird.f32 %v1981
        %vm2112 = vweird.f32 %v2105
        %vm2113 = vmor %vm2111, %vm2112
        %v2114 = vsel %vm2113, %v2105, %v2110
        %v2115 = vrsqrt.pop %v1984
        %v2116 = vmul.f32 %v2115, %v1984
        %v2117 = vmul.f32 %v2116, %v2115
        %v2118 = vmul.f32 0.5, %v2117
        %v2119 = vsub.f32 1.5, %v2118
        %v2120 = vmul.f32 %v2115, %v2119
        %vm2121 = vweird.f32 %v1984
        %vm2122 = vweird.f32 %v2115
        %vm2123 = vmor %vm2121, %vm2122
        %v2124 = vsel %vm2123, %v2115, %v2120
        %v2125 = vrsqrt.pop %v1987
        %v2126 = vmul.f32 %v2125, %v1987
        %v2127 = vmul.f32 %v2126, %v2125
        %v2128 = vmul.f32 0.5, %v2127
        %v2129 = vsub.f32 1.5, %v2128
        %v2130 = vmul.f32 %v2125, %v2129
        %vm2131 = vweird.f32 %v1987
        %vm2132 = vweird.f32 %v2125
        %vm2133 = vmor %vm2131, %vm2132
        %v2134 = vsel %vm2133, %v2125, %v2130
        %v2135 = vrsqrt.pop %v1990
        %v2136 = vmul.f32 %v2135, %v1990
        %v2137 = vmul.f32 %v2136, %v2135
        %v2138 = vmul.f32 0.5, %v2137
        %v2139 = vsub.f32 1.5, %v2138
        %v2140 = vmul.f32 %v2135, %v2139
        %vm2141 = vweird.f32 %v1990
        %vm2142 = vweird.f32 %v2135
        %vm2143 = vmor %vm2141, %vm2142
        %v2144 = vsel %vm2143, %v2135, %v2140
        %v2145 = vrsqrt.pop %v1993
        %v2146 = vmul.f32 %v2145, %v1993
        %v2147 = vmul.f32 %v2146, %v2145
        %v2148 = vmul.f32 0.5, %v2147
        %v2149 = vsub.f32 1.5, %v2148
        %v2150 = vmul.f32 %v2145, %v2149
        %vm2151 = vweird.f32 %v1993
        %vm2152 = vweird.f32 %v2145
        %vm2153 = vmor %vm2151, %vm2152
        %v2154 = vsel %vm2153, %v2145, %v2150
        %v2155 = vmul.f32 %v1785, %v2004
        %v2156 = vmul.f32 %v1786, %v2014
        %v2157 = vmul.f32 %v1787, %v2024
        %v2158 = vmul.f32 %v1788, %v2034
        %v2159 = vmul.f32 %v1789, %v2044
        %v2160 = vmul.f32 %v1790, %v2054
        %v2161 = vmul.f32 %v1791, %v2064
        %v2162 = vmul.f32 %v1792, %v2074
        %v2163 = vmul.f32 %v1793, %v2084
        %v2164 = vmul.f32 %v1794, %v2094
        %v2165 = vmul.f32 %v1795, %v2104
        %v2166 = vmul.f32 %v1796, %v2114
        %v2167 = vmul.f32 %v1797, %v2124
        %v2168 = vmul.f32 %v1798, %v2134
        %v2169 = vmul.f32 %v1799, %v2144
        %v2170 = vmul.f32 %v1800, %v2154
        %v2171 = vld [vmem:[%s5] sm:$0x1]
        %v2173 = vperm.slane %v2171, 0
        %v2175 = vmul.f32 %v2155, %v2173
        %v2176 = vmul.f32 %v2156, %v2173
        %v2177 = vmul.f32 %v2157, %v2173
        %v2178 = vmul.f32 %v2158, %v2173
        %v2179 = vmul.f32 %v2159, %v2173
        %v2180 = vmul.f32 %v2160, %v2173
        %v2181 = vmul.f32 %v2161, %v2173
        %v2182 = vmul.f32 %v2162, %v2173
        %v2183 = vmul.f32 %v2163, %v2173
        %v2184 = vmul.f32 %v2164, %v2173
        %v2185 = vmul.f32 %v2165, %v2173
        %v2186 = vmul.f32 %v2166, %v2173
        %v2187 = vmul.f32 %v2167, %v2173
        %v2188 = vmul.f32 %v2168, %v2173
        %v2189 = vmul.f32 %v2169, %v2173
        %v2190 = vmul.f32 %v2170, %v2173
        %v2191 = vld [vmem:[%s6] sm:$0x1]
        %v2193 = vperm.slane %v2191, 0
        %v2195 = vadd.f32 %v2175, %v2193
        %v2196 = vadd.f32 %v2176, %v2193
        %v2197 = vadd.f32 %v2177, %v2193
        %v2198 = vadd.f32 %v2178, %v2193
        %v2199 = vadd.f32 %v2179, %v2193
        %v2200 = vadd.f32 %v2180, %v2193
        %v2201 = vadd.f32 %v2181, %v2193
        %v2202 = vadd.f32 %v2182, %v2193
        %v2203 = vadd.f32 %v2183, %v2193
        %v2204 = vadd.f32 %v2184, %v2193
        %v2205 = vadd.f32 %v2185, %v2193
        %v2206 = vadd.f32 %v2186, %v2193
        %v2207 = vadd.f32 %v2187, %v2193
        %v2208 = vadd.f32 %v2188, %v2193
        %v2209 = vadd.f32 %v2189, %v2193
        %v2210 = vadd.f32 %v2190, %v2193
        %v2211 = vpack.c.bf16 %v2195, %v2195
        %v2212 = vpack.c.bf16 %v2196, %v2196
        %v2213 = vpack.c.bf16 %v2197, %v2197
        %v2214 = vpack.c.bf16 %v2198, %v2198
        %v2215 = vpack.c.bf16 %v2199, %v2199
        %v2216 = vpack.c.bf16 %v2200, %v2200
        %v2217 = vpack.c.bf16 %v2201, %v2201
        %v2218 = vpack.c.bf16 %v2202, %v2202
        %v2219 = vpack.c.bf16 %v2203, %v2203
        %v2220 = vpack.c.bf16 %v2204, %v2204
        %v2221 = vpack.c.bf16 %v2205, %v2205
        %v2222 = vpack.c.bf16 %v2206, %v2206
        %v2223 = vpack.c.bf16 %v2207, %v2207
        %v2224 = vpack.c.bf16 %v2208, %v2208
        %v2225 = vpack.c.bf16 %v2209, %v2209
        %v2226 = vpack.c.bf16 %v2210, %v2210
        %2227 = vst [vmem:[%s534] sm:$0xf] %v2211
        %2228 = vst [vmem:[%s534 + $0x4] sm:$0xf] %v2212
        %2229 = vst [vmem:[%s534 + $0x8] sm:$0xf] %v2213
        %2230 = vst [vmem:[%s534 + $0xc] sm:$0xf] %v2214
        %2231 = vst [vmem:[%s534 + $0x10] sm:$0xf] %v2215
        %2232 = vst [vmem:[%s534 + $0x14] sm:$0xf] %v2216
        %2233 = vst [vmem:[%s534 + $0x18] sm:$0xf] %v2217
        %2234 = vst [vmem:[%s534 + $0x1c] sm:$0xf] %v2218
        %2235 = vst [vmem:[%s534 + $0x20] sm:$0xf] %v2219
        %2236 = vst [vmem:[%s534 + $0x24] sm:$0xf] %v2220
        %2237 = vst [vmem:[%s534 + $0x28] sm:$0xf] %v2221
        %2238 = vst [vmem:[%s534 + $0x2c] sm:$0xf] %v2222
        %2239 = vst [vmem:[%s534 + $0x30] sm:$0xf] %v2223
        %2240 = vst [vmem:[%s534 + $0x34] sm:$0xf] %v2224
        %2241 = vst [vmem:[%s534 + $0x38] sm:$0xf] %v2225
        %2242 = vst [vmem:[%s534 + $0x3c] sm:$0xf] %v2226
        %v2243 = vpack.c.bf16 %v1466, %v1466
        %v2244 = vpack.c.bf16 %v1468, %v1468
        %v2245 = vpack.c.bf16 %v1471, %v1471
        %v2246 = vpack.c.bf16 %v1473, %v1473
        %v2247 = vpack.c.bf16 %v1476, %v1476
        %v2248 = vpack.c.bf16 %v1478, %v1478
        %v2249 = vpack.c.bf16 %v1481, %v1481
        %v2250 = vpack.c.bf16 %v1483, %v1483
        %v2251 = vpack.c.bf16 %v1486, %v1486
        %v2252 = vpack.c.bf16 %v1488, %v1488
        %v2253 = vpack.c.bf16 %v1491, %v1491
        %v2254 = vpack.c.bf16 %v1493, %v1493
        %v2255 = vpack.c.bf16 %v1496, %v1496
        %v2256 = vpack.c.bf16 %v1498, %v1498
        %v2257 = vpack.c.bf16 %v1501, %v1501
        %v2258 = vpack.c.bf16 %v1503, %v1503
        %2259 = vst [vmem:[%s541] sm:$0xf] %v2243
        %2260 = vst [vmem:[%s541 + $0x4] sm:$0xf] %v2244
        %2261 = vst [vmem:[%s541 + $0x8] sm:$0xf] %v2245
        %2262 = vst [vmem:[%s541 + $0xc] sm:$0xf] %v2246
        %2263 = vst [vmem:[%s541 + $0x10] sm:$0xf] %v2247
        %2264 = vst [vmem:[%s541 + $0x14] sm:$0xf] %v2248
        %2265 = vst [vmem:[%s541 + $0x18] sm:$0xf] %v2249
        %2266 = vst [vmem:[%s541 + $0x1c] sm:$0xf] %v2250
        %2267 = vst [vmem:[%s541 + $0x20] sm:$0xf] %v2251
        %2268 = vst [vmem:[%s541 + $0x24] sm:$0xf] %v2252
        %2269 = vst [vmem:[%s541 + $0x28] sm:$0xf] %v2253
        %2270 = vst [vmem:[%s541 + $0x2c] sm:$0xf] %v2254
        %2271 = vst [vmem:[%s541 + $0x30] sm:$0xf] %v2255
        %2272 = vst [vmem:[%s541 + $0x34] sm:$0xf] %v2256
        %2273 = vst [vmem:[%s541 + $0x38] sm:$0xf] %v2257
        %2274 = vst [vmem:[%s541 + $0x3c] sm:$0xf] %v2258
        %s2275 = sand.u32 %s261, 1
        %s2276 = scalar_lea.sflag [#allocation4], %s2275
        %s2277 = sand.u32 %s261, 1
        %s2278 = smul.addr %s2277, 64
        %s2279 = scalar_lea.vmem [#allocation9], %s2278
        %s2280 = sand.u32 %s33, 1
        %s2281 = scalar_lea.sflag [#allocation11], %s2280
        %s2282 = sand.u32 %s289, 1
        %s2283 = smul.addr %s2282, 64
        %s2284 = scalar_lea.vmem [#allocation10], %s2283
        %s2285 = sand.u32 %s33, 1
        %s2286 = scalar_lea.sflag [#allocation11], %s2285
        %s2287 = sand.u32 %s317, 1
        %s2288 = smul.addr %s2287, 64
        %s2289 = scalar_lea.vmem [#allocation12], %s2288
        // Predicated region
        $region73: #{tpu_custom_call.1} parent=55 // pred_check
          %p2290 = pneg %p271
        $region74: #{tpu_custom_call.1} parent=55 // pred_check_branch
          %2292 = sbr.rel (%p2290) target = $region76
        $region75: #{tpu_custom_call.1} parent=55 // pred_region
          %s2293 = smul.u32 16, %s38
          %2295 = vsyncadd %s2276, 0
          %s2296 = smul.addr %s37, 32
          %s2297 = sadd.s32 %s2293, %s2296
          %s2298 = smul.addr %s2297, 4
          %s2299 = scalar_lea.hbm %s9, %s2298
          %s2300 = sshll.u32 %s2279, 4
          %s2301 = int_to_ptr.vmem [resolvable:$true] %s2300
          %s2302 = sshll.u32 %s2299, 4
          %s2303 = int_to_ptr.hbm [resolvable:$true] %s2302
          %2308 = dma.vmem_to_hbm [thread:$0]  %s2301, 1024, %s2303, %s2276, 64, 64, 4
        $region76: #{tpu_custom_call.1} parent=55 // pred_fallthru
          _
        // Predicated region
        $region77: #{tpu_custom_call.1} parent=55 // pred_check
          %p2309 = pneg %p299
        $region78: #{tpu_custom_call.1} parent=55 // pred_check_branch
          %2311 = sbr.rel (%p2309) target = $region80
        $region79: #{tpu_custom_call.1} parent=55 // pred_region
          %s2312 = smul.u32 16, %s38
          %2314 = vsyncadd %s2281, 0
          %s2315 = smul.addr %s37, 32
          %s2316 = sadd.s32 %s2312, %s2315
          %s2317 = smul.addr %s2316, 4
          %s2318 = scalar_lea.hbm %s10, %s2317
          %s2319 = sshll.u32 %s2284, 4
          %s2320 = int_to_ptr.vmem [resolvable:$true] %s2319
          %s2321 = sshll.u32 %s2318, 4
          %s2322 = int_to_ptr.hbm [resolvable:$true] %s2321
          %2327 = dma.vmem_to_hbm [thread:$0]  %s2320, 1024, %s2322, %s2281, 64, 64, 4
        $region80: #{tpu_custom_call.1} parent=55 // pred_fallthru
          _
        // Predicated region
        $region81: #{tpu_custom_call.1} parent=55 // pred_check
          %p2328 = pneg %p327
        $region82: #{tpu_custom_call.1} parent=55 // pred_check_branch
          %2330 = sbr.rel (%p2328) target = $region84
        $region83: #{tpu_custom_call.1} parent=55 // pred_region
          %s2331 = smul.u32 16, %s38
          %2333 = vsyncadd %s2286, 0
          %s2334 = smul.addr %s37, 32
          %s2335 = sadd.s32 %s2331, %s2334
          %s2336 = smul.addr %s2335, 4
          %s2337 = scalar_lea.hbm %s11, %s2336
          %s2338 = sshll.u32 %s2289, 4
          %s2339 = int_to_ptr.vmem [resolvable:$true] %s2338
          %s2340 = sshll.u32 %s2337, 4
          %s2341 = int_to_ptr.hbm [resolvable:$true] %s2340
          %2346 = dma.vmem_to_hbm [thread:$0]  %s2339, 1024, %s2341, %s2286, 64, 64, 4
        $region84: #{tpu_custom_call.1} parent=55 // pred_fallthru
          _
      $region56: #{tpu_custom_call.1} parent=5 // pred_fallthru
        _
      %p2347 = scmp.le.s32.totalorder 2, %s28
      // Predicated region
      $region85: #{tpu_custom_call.1} parent=5 // pred_check
        %p2348 = pneg %p2347
      $region86: #{tpu_custom_call.1} parent=5 // pred_check_branch
        %2350 = sbr.rel (%p2348) target = $region88
      $region87: #{tpu_custom_call.1} parent=5 // pred_region
        %s2351 = ssub.s32 %s28, 2
        // Predicated region
        $region89: #{tpu_custom_call.1} parent=87 // pred_check
          %p2352 = pneg %p277
        $region90: #{tpu_custom_call.1} parent=87 // pred_check_branch
          %2354 = sbr.rel (%p2352) target = $region92
        $region91: #{tpu_custom_call.1} parent=87 // pred_region
          %s2355 = sand.u32 %s262, 1
          %s2356 = scalar_lea.sflag [#allocation4], %s2355
          %s2357 = sand.u32 %s262, 1
          %s2358 = smul.addr %s2357, 64
          %s2359 = scalar_lea.vmem [#allocation9], %s2358
          %2361 = dma.done %s2356, 1024
        $region92: #{tpu_custom_call.1} parent=87 // pred_fallthru
          _
        // Predicated region
        $region93: #{tpu_custom_call.1} parent=87 // pred_check
          %p2362 = pneg %p305
        $region94: #{tpu_custom_call.1} parent=87 // pred_check_branch
          %2364 = sbr.rel (%p2362) target = $region96
        $region95: #{tpu_custom_call.1} parent=87 // pred_region
          %s2365 = sand.u32 %s34, 1
          %s2366 = scalar_lea.sflag [#allocation11], %s2365
          %s2367 = sand.u32 %s290, 1
          %s2368 = smul.addr %s2367, 64
          %s2369 = scalar_lea.vmem [#allocation10], %s2368
          %2371 = dma.done %s2366, 1024
        $region96: #{tpu_custom_call.1} parent=87 // pred_fallthru
          _
        // Predicated region
        $region97: #{tpu_custom_call.1} parent=87 // pred_check
          %p2372 = pneg %p333
        $region98: #{tpu_custom_call.1} parent=87 // pred_check_branch
          %2374 = sbr.rel (%p2372) target = $region100
        $region99: #{tpu_custom_call.1} parent=87 // pred_region
          %s2375 = sand.u32 %s34, 1
          %s2376 = scalar_lea.sflag [#allocation11], %s2375
          %s2377 = sand.u32 %s318, 1
          %s2378 = smul.addr %s2377, 64
          %s2379 = scalar_lea.vmem [#allocation12], %s2378
          %2381 = dma.done %s2376, 1024
        $region100: #{tpu_custom_call.1} parent=87 // pred_fallthru
          _
      $region88: #{tpu_custom_call.1} parent=5 // pred_fallthru
        _
    $region6: #{tpu_custom_call.1} parent=1 // loop_footer
      %s32 = sadd.s32 1, %s28
    $region7: #{tpu_custom_call.1} parent=1 // loop_footer_branch
      %27 = sbr.rel target = $region3
    $region8: #{tpu_custom_call.1} parent=1 // loop_exit
      _
    %2382 = vsyncpa [#allocation3], 1
    %s2383 = scalar_lea.sflag [#allocation3], 1
    %2384 = vsyncpa %s2383, 1
    %2385 = vsyncpa [#allocation6], 1
    %2386 = vsyncpa [#allocation4], 1
    %s2387 = scalar_lea.sflag [#allocation4], 1
    %2388 = vsyncpa %s2387, 1
    %2389 = vsyncpa [#allocation11], 1
    %s2390 = scalar_lea.sflag [#allocation11], 1
    %2391 = vsyncpa %s2390, 1

</llo_original>
